<compile_context>
chip_gen: v7x
topology: tpu7x:2x2x1
jax: 0.10.0
libtpu: 0.0.40
codegen_flags: <defaults>
</compile_context>

<pallas_src>
import functools
import math

import jax
import jax.numpy as jnp
import numpy as np
from jax.experimental import pallas as pl
from jax.experimental.pallas import tpu as pltpu


# ------------------------------ hyperparameters ------------------------------
class HP:
    converter_input_channel_size = 32
    converter_pre_conv_channels = 32
    converter_conv_channels = 32
    converter_post_conv_channels = 32
    converter_pre_layer_size = 2
    converter_layer_size = 2
    converter_post_layer_size = 2
    converter_conv_width = 3
    converter_conv_trans_width = 4      # ConvTranspose1d: k=4, stride=2, pad=1
    converter_dilation_base = 2
    converter_norm = None               # TODO(synk): norm kind unknown -> skipped
    converter_dp = 0.0                  # dropout = identity in eval
    converter_pool_kind = "avg"         # TODO(synk): 'max' variant not implemented
    converter_pool_kernel_size = 4
    fft_size = 128
    debug = False


hp = HP()
MAG_CHANNELS = hp.fft_size // 2 + 1     # 65
MAG_PAD = 128                           # lane-dense padded mag channel count
SHRINK = 4                              # length_shrink_rate of the first ConvBlockE
W_SLAB_COLS = 256                       # widest fused weight (mag GLU head: 2*128)


# ---------------------- static per-layer plan + slab offsets ----------------------
def build_plan():
    cin0 = hp.converter_input_channel_size
    cpre = hp.converter_pre_conv_channels
    cmid = hp.converter_conv_channels
    cpost = hp.converter_post_conv_channels
    base = hp.converter_dilation_base
    kw = hp.converter_conv_width

    def conv(k, dil, cin, cout, cin_real, cout_real, glu, act):
        return dict(kind="conv", k=k, dil=dil, cin=cin, cout=cout,
                    cin_real=cin_real, cout_real=cout_real, glu=glu, act=act)

    layers = []
    # ConvBlockE #0 (k=1, glu=False).  Its length_shrink_rate=4 avg-pool is
    # commuted with this pointwise conv and applied to the input in the wrapper.
    # TODO(synk): ConvBlockE default activation unknown -> assumed identity
    #             (the pool/conv commute relies on that same assumption).
    layers.append(conv(1, 1, cin0, cpre, cin0, cpre, False, "none"))
    for i in range(hp.converter_pre_layer_size):
        layers.append(conv(kw, base ** (i % 2), cpre, cpre, cpre, cpre, True, "none"))
    layers.append(dict(kind="convT", cin=cpre, cout=cmid, cin_real=cpre, cout_real=cmid))
    for i in range(hp.converter_layer_size):
        layers.append(conv(kw, base ** (i % 2), cmid, cmid, cmid, cmid, True, "none"))
    layers.append(dict(kind="convT", cin=cmid, cout=cpost, cin_real=cmid, cout_real=cpost))
    for i in range(hp.converter_post_layer_size):
        layers.append(conv(kw, base ** (i % 2), cpost, cpost, cpost, cpost, True, "none"))
    # mag head: GLU conv -> 65 channels (lane-padded to 128), then sigmoid conv.
    layers.append(conv(kw, 1, cpost, MAG_PAD, cpost, MAG_CHANNELS, True, "none"))
    layers.append(conv(kw, 1, MAG_PAD, MAG_PAD, MAG_CHANNELS, MAG_CHANNELS,
                       False, "sigmoid"))

    w_off, b_off = 0, 0
    for m in layers:
        if m["kind"] == "conv":
            m["w_rows"] = m["k"] * m["cin"]
            m["w_cols"] = (2 if m["glu"] else 1) * m["cout"]
        else:                                # convT taps: [x[n], x[n-1], x[n+1]]
            m["w_rows"] = 3 * m["cin"]
            m["w_cols"] = 2 * m["cout"]
        m["w_off"], m["b_off"] = w_off, b_off
        w_off += m["w_rows"]                            # row offsets stay 8-aligned
        b_off += ((m["w_cols"] + 127) // 128) * 128     # lane-aligned bias slots
    assert max(m["w_cols"] for m in layers) <= W_SLAB_COLS
    return tuple(layers), w_off, b_off


PLAN, W_SLAB_ROWS, B_SLAB_COLS = build_plan()


# ------------------------------ in-kernel helpers ------------------------------
def _shift_time(x, d):
    """y[m] = x[m + d] with zeros outside [0, L): static slice + zero pad
    (replaces the old T x T selection-matrix matmul)."""
    if d == 0:
        return x
    L, C = x.shape
    if abs(d) >= L:
        return jnp.zeros_like(x)
    pad = jnp.zeros((abs(d), C), x.dtype)
    if d > 0:
        return jnp.concatenate([x[d:, :], pad], axis=0)
    return jnp.concatenate([pad, x[:L + d, :]], axis=0)


# ------------------------------ fused kernel ------------------------------
def _converter_kernel(x_ref, w_ref, b_ref, o_ref, *, plan):
    """Whole Converter forward for one batch element, fully VMEM-resident.

    Activations are channels-last and *phase-major* in time: after each stride-2
    ConvTranspose the even/odd output phases are kept as separate row blocks.
    Interleaved time index n = m * P + p lives at row p * Lp + m.  Every layer is
    one bf16 matmul over a lane-concatenated tap slab; the wrapper undoes the
    final phase permutation.
    """
    Lp = x_ref.shape[1]                       # per-phase length == T // SHRINK
    x = x_ref[0].astype(jnp.float32)          # (Lp, C_in), P == 1
    P = 1

    def phase(v, p):
        return v[p * Lp:(p + 1) * Lp, :]

    for m in plan:
        w = w_ref[m["w_off"]:m["w_off"] + m["w_rows"], 0:m["w_cols"]]
        b = b_ref[0:1, m["b_off"]:m["b_off"] + m["w_cols"]]

        if m["kind"] == "conv":
            k, dil = m["k"], m["dil"]
            if k == 1 and P == 1:
                slab = x
            else:
                rows = []
                for p in range(P):
                    taps = []
                    for j in range(k):
                        # interleaved tap offset -> (source phase, per-phase shift)
                        delta = (j - (k - 1) // 2) * dil
                        taps.append(_shift_time(phase(x, (p + delta) % P),
                                                (p + delta) // P))
                    rows.append(taps[0] if k == 1 else jnp.concatenate(taps, axis=1))
                slab = rows[0] if P == 1 else jnp.concatenate(rows, axis=0)
            y = jnp.dot(slab.astype(jnp.bfloat16), w,
                        preferred_element_type=jnp.float32) + b
            if m["glu"]:
                h = m["cout"]
                y = y[:, :h] * jax.nn.sigmoid(y[:, h:])
            if m["act"] == "sigmoid":
                y = jax.nn.sigmoid(y)
            x = y
        else:
            # ConvTranspose1d(kernel=4, stride=2, padding=1):
            #   out[2n]   = x[n] @ W1 + x[n-1] @ W3
            #   out[2n+1] = x[n] @ W2 + x[n+1] @ W0
            # fused weight rows: [x | x[n-1] | x[n+1]], cols: [even | odd].
            rows = []
            for p in range(P):
                cur = phase(x, p)
                prv = phase(x, p - 1) if p > 0 else _shift_time(phase(x, P - 1), -1)
                nxt = phase(x, p + 1) if p < P - 1 else _shift_time(phase(x, 0), 1)
                rows.append(jnp.concatenate([cur, prv, nxt], axis=1))
            slab = rows[0] if P == 1 else jnp.concatenate(rows, axis=0)
            y = jnp.dot(slab.astype(jnp.bfloat16), w,
                        preferred_element_type=jnp.float32) + b
            h = m["cout"]
            pieces = []
            for p in range(P):            # input phase p -> output phases 2p, 2p+1
                yp = y[p * Lp:(p + 1) * Lp, :]
                pieces.append(yp[:, :h])
                pieces.append(yp[:, h:])
            x = jnp.concatenate(pieces, axis=0)
            P *= 2

    o_ref[0] = x.astype(o_ref.dtype)          # (SHRINK * Lp, MAG_PAD), phase-major


# ------------------------------ wrapper ------------------------------
def _shrink_pool(x):
    """length_shrink_rate avg-pool (kernel == stride == SHRINK) on the raw input,
    commuted with the pointwise (k=1) first conv of the stack."""
    B, T, C = x.shape
    return x.reshape(B, T // SHRINK, SHRINK, C).mean(axis=2)


def converter_forward(w_slab, b_slab, x):
    """x: (B, T, C_in) channels-last -> mag: (B, T, fft_size // 2 + 1)."""
    B, T, Cin = x.shape
    assert T % SHRINK == 0, "length_shrink_rate=4 then 2x2 upsample needs T % 4 == 0"
    Lp = T // SHRINK
    xp = _shrink_pool(x).astype(jnp.bfloat16)          # bf16: halves the input DMA

    out = pl.pallas_call(
        functools.partial(_converter_kernel, plan=PLAN),
        out_shape=jax.ShapeDtypeStruct((B, T, MAG_PAD), jnp.float32),
        grid=(B,),
        in_specs=[
            pl.BlockSpec((1, Lp, Cin), lambda b: (b, 0, 0)),
            pl.BlockSpec((W_SLAB_ROWS, W_SLAB_COLS), lambda b: (0, 0)),
            pl.BlockSpec((1, B_SLAB_COLS), lambda b: (0, 0)),
        ],
        out_specs=pl.BlockSpec((1, T, MAG_PAD), lambda b: (b, 0, 0)),
        compiler_params=pltpu.CompilerParams(
            dimension_semantics=("parallel",)),        # v7x: one batch element per TC
    )(xp, w_slab, b_slab)

    # kernel rows are phase-major: row p * Lp + m  <->  time index m * SHRINK + p
    mag = out.reshape(B, SHRINK, Lp, MAG_PAD).transpose(0, 2, 1, 3)
    return mag.reshape(B, T, MAG_PAD)[:, :, :MAG_CHANNELS]


# ------------------------------ parameters ------------------------------
def init_params(key):
    """Returns (bf16 weight slab, f32 bias slab, raw per-layer weights).
    The raw weights feed the pure-JAX reference; the slabs are what the kernel
    consumes (fused taps + GLU halves, convT taps, lane padding to 128)."""
    keys = jax.random.split(key, 2 * len(PLAN))
    w_slab = np.zeros((W_SLAB_ROWS, W_SLAB_COLS), np.float32)
    b_slab = np.zeros((1, B_SLAB_COLS), np.float32)
    raw = []
    for i, m in enumerate(PLAN):
        kw_, kb_ = keys[2 * i], keys[2 * i + 1]
        if m["kind"] == "conv":
            k, cin_r, cout_r = m["k"], m["cin_real"], m["cout_real"]
            halves = 2 if m["glu"] else 1
            ncols = halves * cout_r
            gain = 2.0 if m["glu"] else 1.0
            w = jax.random.normal(kw_, (k, cin_r, ncols), jnp.float32)
            w = (w * (gain / math.sqrt(k * cin_r))).astype(jnp.bfloat16)
            b = jax.random.normal(kb_, (ncols,), jnp.float32) * 0.2
            raw.append({"w": w, "b": b})
            wq, bq = np.asarray(w.astype(jnp.float32)), np.asarray(b)
            for hh in range(halves):
                c0 = hh * m["cout"]
                for j in range(k):
                    r0 = m["w_off"] + j * m["cin"]
                    w_slab[r0:r0 + cin_r, c0:c0 + cout_r] = \
                        wq[j, :, hh * cout_r:(hh + 1) * cout_r]
                b_slab[0, m["b_off"] + c0:m["b_off"] + c0 + cout_r] = \
                    bq[hh * cout_r:(hh + 1) * cout_r]
        else:
            cin, cout = m["cin"], m["cout"]
            cin_r, cout_r = m["cin_real"], m["cout_real"]
            w = jax.random.normal(kw_, (4, cin_r, cout_r), jnp.float32)
            w = (w / math.sqrt(2 * cin_r)).astype(jnp.bfloat16)
            b = jax.random.normal(kb_, (cout_r,), jnp.float32) * 0.2
            raw.append({"w": w, "b": b})
            wq, bq = np.asarray(w.astype(jnp.float32)), np.asarray(b)
            r0 = m["w_off"]
            w_slab[r0:r0 + cin_r, 0:cout_r] = wq[1]                        # x     -> even
            w_slab[r0:r0 + cin_r, cout:cout + cout_r] = wq[2]              # x     -> odd
            w_slab[r0 + cin:r0 + cin + cin_r, 0:cout_r] = wq[3]            # x[n-1]-> even
            w_slab[r0 + 2 * cin:r0 + 2 * cin + cin_r, cout:cout + cout_r] = wq[0]  # x[n+1]-> odd
            b_slab[0, m["b_off"]:m["b_off"] + cout_r] = bq
            b_slab[0, m["b_off"] + cout:m["b_off"] + cout + cout_r] = bq
    return (jnp.asarray(w_slab).astype(jnp.bfloat16),
            jnp.asarray(b_slab),
            raw)


# ------------------ pure-JAX reference (independent of the kernel) ------------------
def _ref_shift(x, d):
    if d == 0:
        return x
    B, L, C = x.shape
    pad = jnp.zeros((B, abs(d), C), x.dtype)
    if d > 0:
        return jnp.concatenate([x[:, d:, :], pad], axis=1)
    return jnp.concatenate([pad, x[:, :L + d, :]], axis=1)


def reference_forward(raw, xp):
    """Straightforward time-major (non-Pallas) reference from the same pooled
    bf16 input the kernel consumes, using the unfused per-layer weights."""
    h = xp.astype(jnp.float32)
    for m, r in zip(PLAN, raw):
        if m["kind"] == "conv":
            k, dil = m["k"], m["dil"]
            y = None
            for j in range(k):
                xs = _ref_shift(h, (j - (k - 1) // 2) * dil).astype(jnp.bfloat16)
                t = jnp.einsum("blc,cd->bld", xs, r["w"][j],
                               preferred_element_type=jnp.float32)
                y = t if y is None else y + t
            y = y + r["b"]
            if m["glu"]:
                cr = m["cout_real"]
                y = y[..., :cr] * jax.nn.sigmoid(y[..., cr:])
            if m["act"] == "sigmoid":
                y = jax.nn.sigmoid(y)
            h = y
        else:
            xb = h.astype(jnp.bfloat16)
            xm1 = _ref_shift(h, -1).astype(jnp.bfloat16)
            xp1 = _ref_shift(h, 1).astype(jnp.bfloat16)
            even = (jnp.einsum("blc,cd->bld", xb, r["w"][1],
                               preferred_element_type=jnp.float32)
                    + jnp.einsum("blc,cd->bld", xm1, r["w"][3],
                                 preferred_element_type=jnp.float32))
            odd = (jnp.einsum("blc,cd->bld", xb, r["w"][2],
                              preferred_element_type=jnp.float32)
                   + jnp.einsum("blc,cd->bld", xp1, r["w"][0],
                                preferred_element_type=jnp.float32))
            y = jnp.stack([even, odd], axis=2)                 # (B, L, 2, C)
            Bn, Ln, _, Cn = y.shape
            h = y.reshape(Bn, 2 * Ln, Cn) + r["b"]
    return h


# ------------------------------ demo / smoke test ------------------------------
if __name__ == "__main__":
    root = jax.random.PRNGKey(0)
    pkey, xkey = jax.random.split(root)
    w_slab, b_slab, raw = init_params(pkey)

    B, T = 2, 16
    x = jax.random.normal(xkey, (B, T, hp.converter_input_channel_size),
                          dtype=jnp.float32)

    fwd = jax.jit(converter_forward)
    mag = fwd(w_slab, b_slab, x)
    jax.block_until_ready(mag)

    assert mag.shape == (B, T, MAG_CHANNELS)
    assert bool(jnp.all(jnp.isfinite(mag)))
    assert bool(jnp.all((mag >= 0.0) & (mag <= 1.0)))          # final sigmoid

    ref = reference_forward(raw, _shrink_pool(x).astype(jnp.bfloat16))
    err = float(jnp.max(jnp.abs(mag - ref)))
    assert err < 2e-2, f"kernel vs reference mismatch: max abs err = {err}"

    print("KERNEL_OK")
</pallas_src>

<mosaic_0001>
module attributes {stable_mosaic.version = 11 : i64} {
  func.func @_converter_kernel(%arg0: i32, %arg1: memref<1x4x32xbf16, #tpu.memory_space<vmem>>, %arg2: memref<1280x256xbf16, #tpu.memory_space<vmem>>, %arg3: memref<1x1536xf32, #tpu.memory_space<vmem>>, %arg4: memref<1x16x128xf32, #tpu.memory_space<vmem>>) attributes {dimension_semantics = [#tpu.dimension_semantics<parallel>], iteration_bounds = array<i64: 2>, scalar_prefetch = 0 : i64, scratch_operands = 0 : i64, tpu.core_type = #tpu.core_type<tc>, window_params = [{transform_indices = @transform_0, window_bounds = array<i64: 1, 4, 32>}, {pipeline_mode = #tpu.pipeline_mode<synchronous>, transform_indices = @transform_1, window_bounds = array<i64: 1280, 256>}, {pipeline_mode = #tpu.pipeline_mode<synchronous>, transform_indices = @transform_2, window_bounds = array<i64: 1, 1536>}, {transform_indices = @transform_3, window_bounds = array<i64: 1, 16, 128>}]} {
    %c0 = arith.constant 0 : index
    %c0_0 = arith.constant 0 : index
    %c0_1 = arith.constant 0 : index
    %0 = vector.load %arg1[%c0, %c0_0, %c0_1] : memref<1x4x32xbf16, #tpu.memory_space<vmem>>, vector<1x4x32xbf16>
    %1 = vector.shape_cast %0 : vector<1x4x32xbf16> to vector<4x32xbf16>
    %2 = arith.extf %1 : vector<4x32xbf16> to vector<4x32xf32>
    %c0_2 = arith.constant 0 : index
    %c0_3 = arith.constant 0 : index
    %3 = vector.load %arg2[%c0_2, %c0_3] : memref<1280x256xbf16, #tpu.memory_space<vmem>>, vector<32x32xbf16>
    %c0_4 = arith.constant 0 : index
    %c0_5 = arith.constant 0 : index
    %4 = vector.load %arg3[%c0_4, %c0_5] : memref<1x1536xf32, #tpu.memory_space<vmem>>, vector<1x32xf32>
    %5 = arith.truncf %2 : vector<4x32xf32> to vector<4x32xbf16>
    %cst = arith.constant dense<0.000000e+00> : vector<4x32xf32>
    %6 = tpu.matmul %5, %3, %cst {dimension_numbers = #tpu.dot_dimension_numbers<[1], [0], [0], [1], [0, 0, 1, 1], [], []>} : vector<4x32xbf16>, vector<32x32xbf16>, vector<4x32xf32> -> vector<4x32xf32>
    %7 = vector.broadcast %4 : vector<1x32xf32> to vector<4x32xf32>
    %8 = arith.addf %6, %7 : vector<4x32xf32>
    %c32 = arith.constant 32 : index
    %c0_6 = arith.constant 0 : index
    %9 = vector.load %arg2[%c32, %c0_6] : memref<1280x256xbf16, #tpu.memory_space<vmem>>, vector<96x64xbf16>
    %c0_7 = arith.constant 0 : index
    %c128 = arith.constant 128 : index
    %10 = vector.load %arg3[%c0_7, %c128] : memref<1x1536xf32, #tpu.memory_space<vmem>>, vector<1x64xf32>
    %cst_8 = arith.constant 0.000000e+00 : f32
    %11 = vector.broadcast %cst_8 : f32 to vector<1x32xf32>
    %12 = vector.extract_strided_slice %8 {offsets = [0, 0], sizes = [3, 32], strides = [1, 1]} : vector<4x32xf32> to vector<3x32xf32>
    %13 = tpu.concatenate %11, %12 in 0 : vector<1x32xf32>, vector<3x32xf32> -> vector<4x32xf32>
    %cst_9 = arith.constant 0.000000e+00 : f32
    %14 = vector.broadcast %cst_9 : f32 to vector<1x32xf32>
    %15 = vector.extract_strided_slice %8 {offsets = [1, 0], sizes = [3, 32], strides = [1, 1]} : vector<4x32xf32> to vector<3x32xf32>
    %16 = tpu.concatenate %15, %14 in 0 : vector<3x32xf32>, vector<1x32xf32> -> vector<4x32xf32>
    %17 = tpu.concatenate %13, %8, %16 in 1 : vector<4x32xf32>, vector<4x32xf32>, vector<4x32xf32> -> vector<4x96xf32>
    %18 = arith.truncf %17 : vector<4x96xf32> to vector<4x96xbf16>
    %cst_10 = arith.constant dense<0.000000e+00> : vector<4x64xf32>
    %19 = tpu.matmul %18, %9, %cst_10 {dimension_numbers = #tpu.dot_dimension_numbers<[1], [0], [0], [1], [0, 0, 1, 1], [], []>} : vector<4x96xbf16>, vector<96x64xbf16>, vector<4x64xf32> -> vector<4x64xf32>
    %20 = vector.broadcast %10 : vector<1x64xf32> to vector<4x64xf32>
    %21 = arith.addf %19, %20 : vector<4x64xf32>
    %22 = vector.extract_strided_slice %21 {offsets = [0, 0], sizes = [4, 32], strides = [1, 1]} : vector<4x64xf32> to vector<4x32xf32>
    %23 = vector.extract_strided_slice %21 {offsets = [0, 32], sizes = [4, 32], strides = [1, 1]} : vector<4x64xf32> to vector<4x32xf32>
    %24 = arith.negf %23 : vector<4x32xf32>
    %25 = math.exp %24 : vector<4x32xf32>
    %cst_11 = arith.constant 1.000000e+00 : f32
    %26 = vector.broadcast %cst_11 : f32 to vector<4x32xf32>
    %27 = arith.addf %26, %25 : vector<4x32xf32>
    %28 = arith.divf %26, %27 : vector<4x32xf32>
    %29 = arith.mulf %22, %28 : vector<4x32xf32>
    %c128_12 = arith.constant 128 : index
    %c0_13 = arith.constant 0 : index
    %30 = vector.load %arg2[%c128_12, %c0_13] : memref<1280x256xbf16, #tpu.memory_space<vmem>>, vector<96x64xbf16>
    %c0_14 = arith.constant 0 : index
    %c256 = arith.constant 256 : index
    %31 = vector.load %arg3[%c0_14, %c256] : memref<1x1536xf32, #tpu.memory_space<vmem>>, vector<1x64xf32>
    %cst_15 = arith.constant 0.000000e+00 : f32
    %32 = vector.broadcast %cst_15 : f32 to vector<2x32xf32>
    %33 = vector.extract_strided_slice %29 {offsets = [0, 0], sizes = [2, 32], strides = [1, 1]} : vector<4x32xf32> to vector<2x32xf32>
    %34 = tpu.concatenate %32, %33 in 0 : vector<2x32xf32>, vector<2x32xf32> -> vector<4x32xf32>
    %cst_16 = arith.constant 0.000000e+00 : f32
    %35 = vector.broadcast %cst_16 : f32 to vector<2x32xf32>
    %36 = vector.extract_strided_slice %29 {offsets = [2, 0], sizes = [2, 32], strides = [1, 1]} : vector<4x32xf32> to vector<2x32xf32>
    %37 = tpu.concatenate %36, %35 in 0 : vector<2x32xf32>, vector<2x32xf32> -> vector<4x32xf32>
    %38 = tpu.concatenate %34, %29, %37 in 1 : vector<4x32xf32>, vector<4x32xf32>, vector<4x32xf32> -> vector<4x96xf32>
    %39 = arith.truncf %38 : vector<4x96xf32> to vector<4x96xbf16>
    %cst_17 = arith.constant dense<0.000000e+00> : vector<4x64xf32>
    %40 = tpu.matmul %39, %30, %cst_17 {dimension_numbers = #tpu.dot_dimension_numbers<[1], [0], [0], [1], [0, 0, 1, 1], [], []>} : vector<4x96xbf16>, vector<96x64xbf16>, vector<4x64xf32> -> vector<4x64xf32>
    %41 = vector.broadcast %31 : vector<1x64xf32> to vector<4x64xf32>
    %42 = arith.addf %40, %41 : vector<4x64xf32>
    %43 = vector.extract_strided_slice %42 {offsets = [0, 0], sizes = [4, 32], strides = [1, 1]} : vector<4x64xf32> to vector<4x32xf32>
    %44 = vector.extract_strided_slice %42 {offsets = [0, 32], sizes = [4, 32], strides = [1, 1]} : vector<4x64xf32> to vector<4x32xf32>
    %45 = arith.negf %44 : vector<4x32xf32>
    %46 = math.exp %45 : vector<4x32xf32>
    %cst_18 = arith.constant 1.000000e+00 : f32
    %47 = vector.broadcast %cst_18 : f32 to vector<4x32xf32>
    %48 = arith.addf %47, %46 : vector<4x32xf32>
    %49 = arith.divf %47, %48 : vector<4x32xf32>
    %50 = arith.mulf %43, %49 : vector<4x32xf32>
    %c224 = arith.constant 224 : index
    %c0_19 = arith.constant 0 : index
    %51 = vector.load %arg2[%c224, %c0_19] : memref<1280x256xbf16, #tpu.memory_space<vmem>>, vector<96x64xbf16>
    %c0_20 = arith.constant 0 : index
    %c384 = arith.constant 384 : index
    %52 = vector.load %arg3[%c0_20, %c384] : memref<1x1536xf32, #tpu.memory_space<vmem>>, vector<1x64xf32>
    %cst_21 = arith.constant 0.000000e+00 : f32
    %53 = vector.broadcast %cst_21 : f32 to vector<1x32xf32>
    %54 = vector.extract_strided_slice %50 {offsets = [0, 0], sizes = [3, 32], strides = [1, 1]} : vector<4x32xf32> to vector<3x32xf32>
    %55 = tpu.concatenate %53, %54 in 0 : vector<1x32xf32>, vector<3x32xf32> -> vector<4x32xf32>
    %cst_22 = arith.constant 0.000000e+00 : f32
    %56 = vector.broadcast %cst_22 : f32 to vector<1x32xf32>
    %57 = vector.extract_strided_slice %50 {offsets = [1, 0], sizes = [3, 32], strides = [1, 1]} : vector<4x32xf32> to vector<3x32xf32>
    %58 = tpu.concatenate %57, %56 in 0 : vector<3x32xf32>, vector<1x32xf32> -> vector<4x32xf32>
    %59 = tpu.concatenate %50, %55, %58 in 1 : vector<4x32xf32>, vector<4x32xf32>, vector<4x32xf32> -> vector<4x96xf32>
    %60 = arith.truncf %59 : vector<4x96xf32> to vector<4x96xbf16>
    %cst_23 = arith.constant dense<0.000000e+00> : vector<4x64xf32>
    %61 = tpu.matmul %60, %51, %cst_23 {dimension_numbers = #tpu.dot_dimension_numbers<[1], [0], [0], [1], [0, 0, 1, 1], [], []>} : vector<4x96xbf16>, vector<96x64xbf16>, vector<4x64xf32> -> vector<4x64xf32>
    %62 = vector.broadcast %52 : vector<1x64xf32> to vector<4x64xf32>
    %63 = arith.addf %61, %62 : vector<4x64xf32>
    %64 = vector.extract_strided_slice %63 {offsets = [0, 0], sizes = [4, 32], strides = [1, 1]} : vector<4x64xf32> to vector<4x32xf32>
    %65 = vector.extract_strided_slice %63 {offsets = [0, 32], sizes = [4, 32], strides = [1, 1]} : vector<4x64xf32> to vector<4x32xf32>
    %66 = tpu.concatenate %64, %65 in 0 : vector<4x32xf32>, vector<4x32xf32> -> vector<8x32xf32>
    %c320 = arith.constant 320 : index
    %c0_24 = arith.constant 0 : index
    %67 = vector.load %arg2[%c320, %c0_24] : memref<1280x256xbf16, #tpu.memory_space<vmem>>, vector<96x64xbf16>
    %c0_25 = arith.constant 0 : index
    %c512 = arith.constant 512 : index
    %68 = vector.load %arg3[%c0_25, %c512] : memref<1x1536xf32, #tpu.memory_space<vmem>>, vector<1x64xf32>
    %69 = vector.extract_strided_slice %66 {offsets = [4, 0], sizes = [4, 32], strides = [1, 1]} : vector<8x32xf32> to vector<4x32xf32>
    %cst_26 = arith.constant 0.000000e+00 : f32
    %70 = vector.broadcast %cst_26 : f32 to vector<1x32xf32>
    %71 = vector.extract_strided_slice %69 {offsets = [0, 0], sizes = [3, 32], strides = [1, 1]} : vector<4x32xf32> to vector<3x32xf32>
    %72 = tpu.concatenate %70, %71 in 0 : vector<1x32xf32>, vector<3x32xf32> -> vector<4x32xf32>
    %73 = vector.extract_strided_slice %66 {offsets = [0, 0], sizes = [4, 32], strides = [1, 1]} : vector<8x32xf32> to vector<4x32xf32>
    %74 = vector.extract_strided_slice %66 {offsets = [4, 0], sizes = [4, 32], strides = [1, 1]} : vector<8x32xf32> to vector<4x32xf32>
    %75 = tpu.concatenate %72, %73, %74 in 1 : vector<4x32xf32>, vector<4x32xf32>, vector<4x32xf32> -> vector<4x96xf32>
    %76 = vector.extract_strided_slice %66 {offsets = [0, 0], sizes = [4, 32], strides = [1, 1]} : vector<8x32xf32> to vector<4x32xf32>
    %77 = vector.extract_strided_slice %66 {offsets = [4, 0], sizes = [4, 32], strides = [1, 1]} : vector<8x32xf32> to vector<4x32xf32>
    %78 = vector.extract_strided_slice %66 {offsets = [0, 0], sizes = [4, 32], strides = [1, 1]} : vector<8x32xf32> to vector<4x32xf32>
    %cst_27 = arith.constant 0.000000e+00 : f32
    %79 = vector.broadcast %cst_27 : f32 to vector<1x32xf32>
    %80 = vector.extract_strided_slice %78 {offsets = [1, 0], sizes = [3, 32], strides = [1, 1]} : vector<4x32xf32> to vector<3x32xf32>
    %81 = tpu.concatenate %80, %79 in 0 : vector<3x32xf32>, vector<1x32xf32> -> vector<4x32xf32>
    %82 = tpu.concatenate %76, %77, %81 in 1 : vector<4x32xf32>, vector<4x32xf32>, vector<4x32xf32> -> vector<4x96xf32>
    %83 = tpu.concatenate %75, %82 in 0 : vector<4x96xf32>, vector<4x96xf32> -> vector<8x96xf32>
    %84 = arith.truncf %83 : vector<8x96xf32> to vector<8x96xbf16>
    %cst_28 = arith.constant dense<0.000000e+00> : vector<8x64xf32>
    %85 = tpu.matmul %84, %67, %cst_28 {dimension_numbers = #tpu.dot_dimension_numbers<[1], [0], [0], [1], [0, 0, 1, 1], [], []>} : vector<8x96xbf16>, vector<96x64xbf16>, vector<8x64xf32> -> vector<8x64xf32>
    %86 = vector.broadcast %68 : vector<1x64xf32> to vector<8x64xf32>
    %87 = arith.addf %85, %86 : vector<8x64xf32>
    %88 = vector.extract_strided_slice %87 {offsets = [0, 0], sizes = [8, 32], strides = [1, 1]} : vector<8x64xf32> to vector<8x32xf32>
    %89 = vector.extract_strided_slice %87 {offsets = [0, 32], sizes = [8, 32], strides = [1, 1]} : vector<8x64xf32> to vector<8x32xf32>
    %90 = arith.negf %89 : vector<8x32xf32>
    %91 = math.exp %90 : vector<8x32xf32>
    %cst_29 = arith.constant 1.000000e+00 : f32
    %92 = vector.broadcast %cst_29 : f32 to vector<8x32xf32>
    %93 = arith.addf %92, %91 : vector<8x32xf32>
    %94 = arith.divf %92, %93 : vector<8x32xf32>
    %95 = arith.mulf %88, %94 : vector<8x32xf32>
    %c416 = arith.constant 416 : index
    %c0_30 = arith.constant 0 : index
    %96 = vector.load %arg2[%c416, %c0_30] : memref<1280x256xbf16, #tpu.memory_space<vmem>>, vector<96x64xbf16>
    %c0_31 = arith.constant 0 : index
    %c640 = arith.constant 640 : index
    %97 = vector.load %arg3[%c0_31, %c640] : memref<1x1536xf32, #tpu.memory_space<vmem>>, vector<1x64xf32>
    %98 = vector.extract_strided_slice %95 {offsets = [0, 0], sizes = [4, 32], strides = [1, 1]} : vector<8x32xf32> to vector<4x32xf32>
    %cst_32 = arith.constant 0.000000e+00 : f32
    %99 = vector.broadcast %cst_32 : f32 to vector<1x32xf32>
    %100 = vector.extract_strided_slice %98 {offsets = [0, 0], sizes = [3, 32], strides = [1, 1]} : vector<4x32xf32> to vector<3x32xf32>
    %101 = tpu.concatenate %99, %100 in 0 : vector<1x32xf32>, vector<3x32xf32> -> vector<4x32xf32>
    %102 = vector.extract_strided_slice %95 {offsets = [0, 0], sizes = [4, 32], strides = [1, 1]} : vector<8x32xf32> to vector<4x32xf32>
    %103 = vector.extract_strided_slice %95 {offsets = [0, 0], sizes = [4, 32], strides = [1, 1]} : vector<8x32xf32> to vector<4x32xf32>
    %cst_33 = arith.constant 0.000000e+00 : f32
    %104 = vector.broadcast %cst_33 : f32 to vector<1x32xf32>
    %105 = vector.extract_strided_slice %103 {offsets = [1, 0], sizes = [3, 32], strides = [1, 1]} : vector<4x32xf32> to vector<3x32xf32>
    %106 = tpu.concatenate %105, %104 in 0 : vector<3x32xf32>, vector<1x32xf32> -> vector<4x32xf32>
    %107 = tpu.concatenate %101, %102, %106 in 1 : vector<4x32xf32>, vector<4x32xf32>, vector<4x32xf32> -> vector<4x96xf32>
    %108 = vector.extract_strided_slice %95 {offsets = [4, 0], sizes = [4, 32], strides = [1, 1]} : vector<8x32xf32> to vector<4x32xf32>
    %cst_34 = arith.constant 0.000000e+00 : f32
    %109 = vector.broadcast %cst_34 : f32 to vector<1x32xf32>
    %110 = vector.extract_strided_slice %108 {offsets = [0, 0], sizes = [3, 32], strides = [1, 1]} : vector<4x32xf32> to vector<3x32xf32>
    %111 = tpu.concatenate %109, %110 in 0 : vector<1x32xf32>, vector<3x32xf32> -> vector<4x32xf32>
    %112 = vector.extract_strided_slice %95 {offsets = [4, 0], sizes = [4, 32], strides = [1, 1]} : vector<8x32xf32> to vector<4x32xf32>
    %113 = vector.extract_strided_slice %95 {offsets = [4, 0], sizes = [4, 32], strides = [1, 1]} : vector<8x32xf32> to vector<4x32xf32>
    %cst_35 = arith.constant 0.000000e+00 : f32
    %114 = vector.broadcast %cst_35 : f32 to vector<1x32xf32>
    %115 = vector.extract_strided_slice %113 {offsets = [1, 0], sizes = [3, 32], strides = [1, 1]} : vector<4x32xf32> to vector<3x32xf32>
    %116 = tpu.concatenate %115, %114 in 0 : vector<3x32xf32>, vector<1x32xf32> -> vector<4x32xf32>
    %117 = tpu.concatenate %111, %112, %116 in 1 : vector<4x32xf32>, vector<4x32xf32>, vector<4x32xf32> -> vector<4x96xf32>
    %118 = tpu.concatenate %107, %117 in 0 : vector<4x96xf32>, vector<4x96xf32> -> vector<8x96xf32>
    %119 = arith.truncf %118 : vector<8x96xf32> to vector<8x96xbf16>
    %cst_36 = arith.constant dense<0.000000e+00> : vector<8x64xf32>
    %120 = tpu.matmul %119, %96, %cst_36 {dimension_numbers = #tpu.dot_dimension_numbers<[1], [0], [0], [1], [0, 0, 1, 1], [], []>} : vector<8x96xbf16>, vector<96x64xbf16>, vector<8x64xf32> -> vector<8x64xf32>
    %121 = vector.broadcast %97 : vector<1x64xf32> to vector<8x64xf32>
    %122 = arith.addf %120, %121 : vector<8x64xf32>
    %123 = vector.extract_strided_slice %122 {offsets = [0, 0], sizes = [8, 32], strides = [1, 1]} : vector<8x64xf32> to vector<8x32xf32>
    %124 = vector.extract_strided_slice %122 {offsets = [0, 32], sizes = [8, 32], strides = [1, 1]} : vector<8x64xf32> to vector<8x32xf32>
    %125 = arith.negf %124 : vector<8x32xf32>
    %126 = math.exp %125 : vector<8x32xf32>
    %cst_37 = arith.constant 1.000000e+00 : f32
    %127 = vector.broadcast %cst_37 : f32 to vector<8x32xf32>
    %128 = arith.addf %127, %126 : vector<8x32xf32>
    %129 = arith.divf %127, %128 : vector<8x32xf32>
    %130 = arith.mulf %123, %129 : vector<8x32xf32>
    %c512_38 = arith.constant 512 : index
    %c0_39 = arith.constant 0 : index
    %131 = vector.load %arg2[%c512_38, %c0_39] : memref<1280x256xbf16, #tpu.memory_space<vmem>>, vector<96x64xbf16>
    %c0_40 = arith.constant 0 : index
    %c768 = arith.constant 768 : index
    %132 = vector.load %arg3[%c0_40, %c768] : memref<1x1536xf32, #tpu.memory_space<vmem>>, vector<1x64xf32>
    %133 = vector.extract_strided_slice %130 {offsets = [0, 0], sizes = [4, 32], strides = [1, 1]} : vector<8x32xf32> to vector<4x32xf32>
    %134 = vector.extract_strided_slice %130 {offsets = [4, 0], sizes = [4, 32], strides = [1, 1]} : vector<8x32xf32> to vector<4x32xf32>
    %cst_41 = arith.constant 0.000000e+00 : f32
    %135 = vector.broadcast %cst_41 : f32 to vector<1x32xf32>
    %136 = vector.extract_strided_slice %134 {offsets = [0, 0], sizes = [3, 32], strides = [1, 1]} : vector<4x32xf32> to vector<3x32xf32>
    %137 = tpu.concatenate %135, %136 in 0 : vector<1x32xf32>, vector<3x32xf32> -> vector<4x32xf32>
    %138 = vector.extract_strided_slice %130 {offsets = [4, 0], sizes = [4, 32], strides = [1, 1]} : vector<8x32xf32> to vector<4x32xf32>
    %139 = tpu.concatenate %133, %137, %138 in 1 : vector<4x32xf32>, vector<4x32xf32>, vector<4x32xf32> -> vector<4x96xf32>
    %140 = vector.extract_strided_slice %130 {offsets = [4, 0], sizes = [4, 32], strides = [1, 1]} : vector<8x32xf32> to vector<4x32xf32>
    %141 = vector.extract_strided_slice %130 {offsets = [0, 0], sizes = [4, 32], strides = [1, 1]} : vector<8x32xf32> to vector<4x32xf32>
    %142 = vector.extract_strided_slice %130 {offsets = [0, 0], sizes = [4, 32], strides = [1, 1]} : vector<8x32xf32> to vector<4x32xf32>
    %cst_42 = arith.constant 0.000000e+00 : f32
    %143 = vector.broadcast %cst_42 : f32 to vector<1x32xf32>
    %144 = vector.extract_strided_slice %142 {offsets = [1, 0], sizes = [3, 32], strides = [1, 1]} : vector<4x32xf32> to vector<3x32xf32>
    %145 = tpu.concatenate %144, %143 in 0 : vector<3x32xf32>, vector<1x32xf32> -> vector<4x32xf32>
    %146 = tpu.concatenate %140, %141, %145 in 1 : vector<4x32xf32>, vector<4x32xf32>, vector<4x32xf32> -> vector<4x96xf32>
    %147 = tpu.concatenate %139, %146 in 0 : vector<4x96xf32>, vector<4x96xf32> -> vector<8x96xf32>
    %148 = arith.truncf %147 : vector<8x96xf32> to vector<8x96xbf16>
    %cst_43 = arith.constant dense<0.000000e+00> : vector<8x64xf32>
    %149 = tpu.matmul %148, %131, %cst_43 {dimension_numbers = #tpu.dot_dimension_numbers<[1], [0], [0], [1], [0, 0, 1, 1], [], []>} : vector<8x96xbf16>, vector<96x64xbf16>, vector<8x64xf32> -> vector<8x64xf32>
    %150 = vector.broadcast %132 : vector<1x64xf32> to vector<8x64xf32>
    %151 = arith.addf %149, %150 : vector<8x64xf32>
    %152 = vector.extract_strided_slice %151 {offsets = [0, 0], sizes = [4, 64], strides = [1, 1]} : vector<8x64xf32> to vector<4x64xf32>
    %153 = vector.extract_strided_slice %152 {offsets = [0, 0], sizes = [4, 32], strides = [1, 1]} : vector<4x64xf32> to vector<4x32xf32>
    %154 = vector.extract_strided_slice %152 {offsets = [0, 32], sizes = [4, 32], strides = [1, 1]} : vector<4x64xf32> to vector<4x32xf32>
    %155 = vector.extract_strided_slice %151 {offsets = [4, 0], sizes = [4, 64], strides = [1, 1]} : vector<8x64xf32> to vector<4x64xf32>
    %156 = vector.extract_strided_slice %155 {offsets = [0, 0], sizes = [4, 32], strides = [1, 1]} : vector<4x64xf32> to vector<4x32xf32>
    %157 = vector.extract_strided_slice %155 {offsets = [0, 32], sizes = [4, 32], strides = [1, 1]} : vector<4x64xf32> to vector<4x32xf32>
    %158 = tpu.concatenate %153, %154, %156, %157 in 0 : vector<4x32xf32>, vector<4x32xf32>, vector<4x32xf32>, vector<4x32xf32> -> vector<16x32xf32>
    %c608 = arith.constant 608 : index
    %c0_44 = arith.constant 0 : index
    %159 = vector.load %arg2[%c608, %c0_44] : memref<1280x256xbf16, #tpu.memory_space<vmem>>, vector<96x64xbf16>
    %c0_45 = arith.constant 0 : index
    %c896 = arith.constant 896 : index
    %160 = vector.load %arg3[%c0_45, %c896] : memref<1x1536xf32, #tpu.memory_space<vmem>>, vector<1x64xf32>
    %161 = vector.extract_strided_slice %158 {offsets = [12, 0], sizes = [4, 32], strides = [1, 1]} : vector<16x32xf32> to vector<4x32xf32>
    %cst_46 = arith.constant 0.000000e+00 : f32
    %162 = vector.broadcast %cst_46 : f32 to vector<1x32xf32>
    %163 = vector.extract_strided_slice %161 {offsets = [0, 0], sizes = [3, 32], strides = [1, 1]} : vector<4x32xf32> to vector<3x32xf32>
    %164 = tpu.concatenate %162, %163 in 0 : vector<1x32xf32>, vector<3x32xf32> -> vector<4x32xf32>
    %165 = vector.extract_strided_slice %158 {offsets = [0, 0], sizes = [4, 32], strides = [1, 1]} : vector<16x32xf32> to vector<4x32xf32>
    %166 = vector.extract_strided_slice %158 {offsets = [4, 0], sizes = [4, 32], strides = [1, 1]} : vector<16x32xf32> to vector<4x32xf32>
    %167 = tpu.concatenate %164, %165, %166 in 1 : vector<4x32xf32>, vector<4x32xf32>, vector<4x32xf32> -> vector<4x96xf32>
    %168 = vector.extract_strided_slice %158 {offsets = [0, 0], sizes = [4, 32], strides = [1, 1]} : vector<16x32xf32> to vector<4x32xf32>
    %169 = vector.extract_strided_slice %158 {offsets = [4, 0], sizes = [4, 32], strides = [1, 1]} : vector<16x32xf32> to vector<4x32xf32>
    %170 = vector.extract_strided_slice %158 {offsets = [8, 0], sizes = [4, 32], strides = [1, 1]} : vector<16x32xf32> to vector<4x32xf32>
    %171 = tpu.concatenate %168, %169, %170 in 1 : vector<4x32xf32>, vector<4x32xf32>, vector<4x32xf32> -> vector<4x96xf32>
    %172 = vector.extract_strided_slice %158 {offsets = [4, 0], sizes = [4, 32], strides = [1, 1]} : vector<16x32xf32> to vector<4x32xf32>
    %173 = vector.extract_strided_slice %158 {offsets = [8, 0], sizes = [4, 32], strides = [1, 1]} : vector<16x32xf32> to vector<4x32xf32>
    %174 = vector.extract_strided_slice %158 {offsets = [12, 0], sizes = [4, 32], strides = [1, 1]} : vector<16x32xf32> to vector<4x32xf32>
    %175 = tpu.concatenate %172, %173, %174 in 1 : vector<4x32xf32>, vector<4x32xf32>, vector<4x32xf32> -> vector<4x96xf32>
    %176 = vector.extract_strided_slice %158 {offsets = [8, 0], sizes = [4, 32], strides = [1, 1]} : vector<16x32xf32> to vector<4x32xf32>
    %177 = vector.extract_strided_slice %158 {offsets = [12, 0], sizes = [4, 32], strides = [1, 1]} : vector<16x32xf32> to vector<4x32xf32>
    %178 = vector.extract_strided_slice %158 {offsets = [0, 0], sizes = [4, 32], strides = [1, 1]} : vector<16x32xf32> to vector<4x32xf32>
    %cst_47 = arith.constant 0.000000e+00 : f32
    %179 = vector.broadcast %cst_47 : f32 to vector<1x32xf32>
    %180 = vector.extract_strided_slice %178 {offsets = [1, 0], sizes = [3, 32], strides = [1, 1]} : vector<4x32xf32> to vector<3x32xf32>
    %181 = tpu.concatenate %180, %179 in 0 : vector<3x32xf32>, vector<1x32xf32> -> vector<4x32xf32>
    %182 = tpu.concatenate %176, %177, %181 in 1 : vector<4x32xf32>, vector<4x32xf32>, vector<4x32xf32> -> vector<4x96xf32>
    %183 = tpu.concatenate %167, %171, %175, %182 in 0 : vector<4x96xf32>, vector<4x96xf32>, vector<4x96xf32>, vector<4x96xf32> -> vector<16x96xf32>
    %184 = arith.truncf %183 : vector<16x96xf32> to vector<16x96xbf16>
    %cst_48 = arith.constant dense<0.000000e+00> : vector<16x64xf32>
    %185 = tpu.matmul %184, %159, %cst_48 {dimension_numbers = #tpu.dot_dimension_numbers<[1], [0], [0], [1], [0, 0, 1, 1], [], []>} : vector<16x96xbf16>, vector<96x64xbf16>, vector<16x64xf32> -> vector<16x64xf32>
    %186 = vector.broadcast %160 : vector<1x64xf32> to vector<16x64xf32>
    %187 = arith.addf %185, %186 : vector<16x64xf32>
    %188 = vector.extract_strided_slice %187 {offsets = [0, 0], sizes = [16, 32], strides = [1, 1]} : vector<16x64xf32> to vector<16x32xf32>
    %189 = vector.extract_strided_slice %187 {offsets = [0, 32], sizes = [16, 32], strides = [1, 1]} : vector<16x64xf32> to vector<16x32xf32>
    %190 = arith.negf %189 : vector<16x32xf32>
    %191 = math.exp %190 : vector<16x32xf32>
    %cst_49 = arith.constant 1.000000e+00 : f32
    %192 = vector.broadcast %cst_49 : f32 to vector<16x32xf32>
    %193 = arith.addf %192, %191 : vector<16x32xf32>
    %194 = arith.divf %192, %193 : vector<16x32xf32>
    %195 = arith.mulf %188, %194 : vector<16x32xf32>
    %c704 = arith.constant 704 : index
    %c0_50 = arith.constant 0 : index
    %196 = vector.load %arg2[%c704, %c0_50] : memref<1280x256xbf16, #tpu.memory_space<vmem>>, vector<96x64xbf16>
    %c0_51 = arith.constant 0 : index
    %c1024 = arith.constant 1024 : index
    %197 = vector.load %arg3[%c0_51, %c1024] : memref<1x1536xf32, #tpu.memory_space<vmem>>, vector<1x64xf32>
    %198 = vector.extract_strided_slice %195 {offsets = [8, 0], sizes = [4, 32], strides = [1, 1]} : vector<16x32xf32> to vector<4x32xf32>
    %cst_52 = arith.constant 0.000000e+00 : f32
    %199 = vector.broadcast %cst_52 : f32 to vector<1x32xf32>
    %200 = vector.extract_strided_slice %198 {offsets = [0, 0], sizes = [3, 32], strides = [1, 1]} : vector<4x32xf32> to vector<3x32xf32>
    %201 = tpu.concatenate %199, %200 in 0 : vector<1x32xf32>, vector<3x32xf32> -> vector<4x32xf32>
    %202 = vector.extract_strided_slice %195 {offsets = [0, 0], sizes = [4, 32], strides = [1, 1]} : vector<16x32xf32> to vector<4x32xf32>
    %203 = vector.extract_strided_slice %195 {offsets = [8, 0], sizes = [4, 32], strides = [1, 1]} : vector<16x32xf32> to vector<4x32xf32>
    %204 = tpu.concatenate %201, %202, %203 in 1 : vector<4x32xf32>, vector<4x32xf32>, vector<4x32xf32> -> vector<4x96xf32>
    %205 = vector.extract_strided_slice %195 {offsets = [12, 0], sizes = [4, 32], strides = [1, 1]} : vector<16x32xf32> to vector<4x32xf32>
    %cst_53 = arith.constant 0.000000e+00 : f32
    %206 = vector.broadcast %cst_53 : f32 to vector<1x32xf32>
    %207 = vector.extract_strided_slice %205 {offsets = [0, 0], sizes = [3, 32], strides = [1, 1]} : vector<4x32xf32> to vector<3x32xf32>
    %208 = tpu.concatenate %206, %207 in 0 : vector<1x32xf32>, vector<3x32xf32> -> vector<4x32xf32>
    %209 = vector.extract_strided_slice %195 {offsets = [4, 0], sizes = [4, 32], strides = [1, 1]} : vector<16x32xf32> to vector<4x32xf32>
    %210 = vector.extract_strided_slice %195 {offsets = [12, 0], sizes = [4, 32], strides = [1, 1]} : vector<16x32xf32> to vector<4x32xf32>
    %211 = tpu.concatenate %208, %209, %210 in 1 : vector<4x32xf32>, vector<4x32xf32>, vector<4x32xf32> -> vector<4x96xf32>
    %212 = vector.extract_strided_slice %195 {offsets = [0, 0], sizes = [4, 32], strides = [1, 1]} : vector<16x32xf32> to vector<4x32xf32>
    %213 = vector.extract_strided_slice %195 {offsets = [8, 0], sizes = [4, 32], strides = [1, 1]} : vector<16x32xf32> to vector<4x32xf32>
    %214 = vector.extract_strided_slice %195 {offsets = [0, 0], sizes = [4, 32], strides = [1, 1]} : vector<16x32xf32> to vector<4x32xf32>
    %cst_54 = arith.constant 0.000000e+00 : f32
    %215 = vector.broadcast %cst_54 : f32 to vector<1x32xf32>
    %216 = vector.extract_strided_slice %214 {offsets = [1, 0], sizes = [3, 32], strides = [1, 1]} : vector<4x32xf32> to vector<3x32xf32>
    %217 = tpu.concatenate %216, %215 in 0 : vector<3x32xf32>, vector<1x32xf32> -> vector<4x32xf32>
    %218 = tpu.concatenate %212, %213, %217 in 1 : vector<4x32xf32>, vector<4x32xf32>, vector<4x32xf32> -> vector<4x96xf32>
    %219 = vector.extract_strided_slice %195 {offsets = [4, 0], sizes = [4, 32], strides = [1, 1]} : vector<16x32xf32> to vector<4x32xf32>
    %220 = vector.extract_strided_slice %195 {offsets = [12, 0], sizes = [4, 32], strides = [1, 1]} : vector<16x32xf32> to vector<4x32xf32>
    %221 = vector.extract_strided_slice %195 {offsets = [4, 0], sizes = [4, 32], strides = [1, 1]} : vector<16x32xf32> to vector<4x32xf32>
    %cst_55 = arith.constant 0.000000e+00 : f32
    %222 = vector.broadcast %cst_55 : f32 to vector<1x32xf32>
    %223 = vector.extract_strided_slice %221 {offsets = [1, 0], sizes = [3, 32], strides = [1, 1]} : vector<4x32xf32> to vector<3x32xf32>
    %224 = tpu.concatenate %223, %222 in 0 : vector<3x32xf32>, vector<1x32xf32> -> vector<4x32xf32>
    %225 = tpu.concatenate %219, %220, %224 in 1 : vector<4x32xf32>, vector<4x32xf32>, vector<4x32xf32> -> vector<4x96xf32>
    %226 = tpu.concatenate %204, %211, %218, %225 in 0 : vector<4x96xf32>, vector<4x96xf32>, vector<4x96xf32>, vector<4x96xf32> -> vector<16x96xf32>
    %227 = arith.truncf %226 : vector<16x96xf32> to vector<16x96xbf16>
    %cst_56 = arith.constant dense<0.000000e+00> : vector<16x64xf32>
    %228 = tpu.matmul %227, %196, %cst_56 {dimension_numbers = #tpu.dot_dimension_numbers<[1], [0], [0], [1], [0, 0, 1, 1], [], []>} : vector<16x96xbf16>, vector<96x64xbf16>, vector<16x64xf32> -> vector<16x64xf32>
    %229 = vector.broadcast %197 : vector<1x64xf32> to vector<16x64xf32>
    %230 = arith.addf %228, %229 : vector<16x64xf32>
    %231 = vector.extract_strided_slice %230 {offsets = [0, 0], sizes = [16, 32], strides = [1, 1]} : vector<16x64xf32> to vector<16x32xf32>
    %232 = vector.extract_strided_slice %230 {offsets = [0, 32], sizes = [16, 32], strides = [1, 1]} : vector<16x64xf32> to vector<16x32xf32>
    %233 = arith.negf %232 : vector<16x32xf32>
    %234 = math.exp %233 : vector<16x32xf32>
    %cst_57 = arith.constant 1.000000e+00 : f32
    %235 = vector.broadcast %cst_57 : f32 to vector<16x32xf32>
    %236 = arith.addf %235, %234 : vector<16x32xf32>
    %237 = arith.divf %235, %236 : vector<16x32xf32>
    %238 = arith.mulf %231, %237 : vector<16x32xf32>
    %c800 = arith.constant 800 : index
    %c0_58 = arith.constant 0 : index
    %239 = vector.load %arg2[%c800, %c0_58] : memref<1280x256xbf16, #tpu.memory_space<vmem>>, vector<96x256xbf16>
    %c0_59 = arith.constant 0 : index
    %c1152 = arith.constant 1152 : index
    %240 = vector.load %arg3[%c0_59, %c1152] : memref<1x1536xf32, #tpu.memory_space<vmem>>, vector<1x256xf32>
    %241 = vector.extract_strided_slice %238 {offsets = [12, 0], sizes = [4, 32], strides = [1, 1]} : vector<16x32xf32> to vector<4x32xf32>
    %cst_60 = arith.constant 0.000000e+00 : f32
    %242 = vector.broadcast %cst_60 : f32 to vector<1x32xf32>
    %243 = vector.extract_strided_slice %241 {offsets = [0, 0], sizes = [3, 32], strides = [1, 1]} : vector<4x32xf32> to vector<3x32xf32>
    %244 = tpu.concatenate %242, %243 in 0 : vector<1x32xf32>, vector<3x32xf32> -> vector<4x32xf32>
    %245 = vector.extract_strided_slice %238 {offsets = [0, 0], sizes = [4, 32], strides = [1, 1]} : vector<16x32xf32> to vector<4x32xf32>
    %246 = vector.extract_strided_slice %238 {offsets = [4, 0], sizes = [4, 32], strides = [1, 1]} : vector<16x32xf32> to vector<4x32xf32>
    %247 = tpu.concatenate %244, %245, %246 in 1 : vector<4x32xf32>, vector<4x32xf32>, vector<4x32xf32> -> vector<4x96xf32>
    %248 = vector.extract_strided_slice %238 {offsets = [0, 0], sizes = [4, 32], strides = [1, 1]} : vector<16x32xf32> to vector<4x32xf32>
    %249 = vector.extract_strided_slice %238 {offsets = [4, 0], sizes = [4, 32], strides = [1, 1]} : vector<16x32xf32> to vector<4x32xf32>
    %250 = vector.extract_strided_slice %238 {offsets = [8, 0], sizes = [4, 32], strides = [1, 1]} : vector<16x32xf32> to vector<4x32xf32>
    %251 = tpu.concatenate %248, %249, %250 in 1 : vector<4x32xf32>, vector<4x32xf32>, vector<4x32xf32> -> vector<4x96xf32>
    %252 = vector.extract_strided_slice %238 {offsets = [4, 0], sizes = [4, 32], strides = [1, 1]} : vector<16x32xf32> to vector<4x32xf32>
    %253 = vector.extract_strided_slice %238 {offsets = [8, 0], sizes = [4, 32], strides = [1, 1]} : vector<16x32xf32> to vector<4x32xf32>
    %254 = vector.extract_strided_slice %238 {offsets = [12, 0], sizes = [4, 32], strides = [1, 1]} : vector<16x32xf32> to vector<4x32xf32>
    %255 = tpu.concatenate %252, %253, %254 in 1 : vector<4x32xf32>, vector<4x32xf32>, vector<4x32xf32> -> vector<4x96xf32>
    %256 = vector.extract_strided_slice %238 {offsets = [8, 0], sizes = [4, 32], strides = [1, 1]} : vector<16x32xf32> to vector<4x32xf32>
    %257 = vector.extract_strided_slice %238 {offsets = [12, 0], sizes = [4, 32], strides = [1, 1]} : vector<16x32xf32> to vector<4x32xf32>
    %258 = vector.extract_strided_slice %238 {offsets = [0, 0], sizes = [4, 32], strides = [1, 1]} : vector<16x32xf32> to vector<4x32xf32>
    %cst_61 = arith.constant 0.000000e+00 : f32
    %259 = vector.broadcast %cst_61 : f32 to vector<1x32xf32>
    %260 = vector.extract_strided_slice %258 {offsets = [1, 0], sizes = [3, 32], strides = [1, 1]} : vector<4x32xf32> to vector<3x32xf32>
    %261 = tpu.concatenate %260, %259 in 0 : vector<3x32xf32>, vector<1x32xf32> -> vector<4x32xf32>
    %262 = tpu.concatenate %256, %257, %261 in 1 : vector<4x32xf32>, vector<4x32xf32>, vector<4x32xf32> -> vector<4x96xf32>
    %263 = tpu.concatenate %247, %251, %255, %262 in 0 : vector<4x96xf32>, vector<4x96xf32>, vector<4x96xf32>, vector<4x96xf32> -> vector<16x96xf32>
    %264 = arith.truncf %263 : vector<16x96xf32> to vector<16x96xbf16>
    %cst_62 = arith.constant dense<0.000000e+00> : vector<16x256xf32>
    %265 = tpu.matmul %264, %239, %cst_62 {dimension_numbers = #tpu.dot_dimension_numbers<[1], [0], [0], [1], [0, 0, 1, 1], [], []>} : vector<16x96xbf16>, vector<96x256xbf16>, vector<16x256xf32> -> vector<16x256xf32>
    %266 = vector.broadcast %240 : vector<1x256xf32> to vector<16x256xf32>
    %267 = arith.addf %265, %266 : vector<16x256xf32>
    %268 = vector.extract_strided_slice %267 {offsets = [0, 0], sizes = [16, 128], strides = [1, 1]} : vector<16x256xf32> to vector<16x128xf32>
    %269 = vector.extract_strided_slice %267 {offsets = [0, 128], sizes = [16, 128], strides = [1, 1]} : vector<16x256xf32> to vector<16x128xf32>
    %270 = arith.negf %269 : vector<16x128xf32>
    %271 = math.exp %270 : vector<16x128xf32>
    %cst_63 = arith.constant 1.000000e+00 : f32
    %272 = vector.broadcast %cst_63 : f32 to vector<16x128xf32>
    %273 = arith.addf %272, %271 : vector<16x128xf32>
    %274 = arith.divf %272, %273 : vector<16x128xf32>
    %275 = arith.mulf %268, %274 : vector<16x128xf32>
    %c896_64 = arith.constant 896 : index
    %c0_65 = arith.constant 0 : index
    %276 = vector.load %arg2[%c896_64, %c0_65] : memref<1280x256xbf16, #tpu.memory_space<vmem>>, vector<384x128xbf16>
    %c0_66 = arith.constant 0 : index
    %c1408 = arith.constant 1408 : index
    %277 = vector.load %arg3[%c0_66, %c1408] : memref<1x1536xf32, #tpu.memory_space<vmem>>, vector<1x128xf32>
    %278 = vector.extract_strided_slice %275 {offsets = [12, 0], sizes = [4, 128], strides = [1, 1]} : vector<16x128xf32> to vector<4x128xf32>
    %cst_67 = arith.constant 0.000000e+00 : f32
    %279 = vector.broadcast %cst_67 : f32 to vector<1x128xf32>
    %280 = vector.extract_strided_slice %278 {offsets = [0, 0], sizes = [3, 128], strides = [1, 1]} : vector<4x128xf32> to vector<3x128xf32>
    %281 = tpu.concatenate %279, %280 in 0 : vector<1x128xf32>, vector<3x128xf32> -> vector<4x128xf32>
    %282 = vector.extract_strided_slice %275 {offsets = [0, 0], sizes = [4, 128], strides = [1, 1]} : vector<16x128xf32> to vector<4x128xf32>
    %283 = vector.extract_strided_slice %275 {offsets = [4, 0], sizes = [4, 128], strides = [1, 1]} : vector<16x128xf32> to vector<4x128xf32>
    %284 = tpu.concatenate %281, %282, %283 in 1 : vector<4x128xf32>, vector<4x128xf32>, vector<4x128xf32> -> vector<4x384xf32>
    %285 = vector.extract_strided_slice %275 {offsets = [0, 0], sizes = [4, 128], strides = [1, 1]} : vector<16x128xf32> to vector<4x128xf32>
    %286 = vector.extract_strided_slice %275 {offsets = [4, 0], sizes = [4, 128], strides = [1, 1]} : vector<16x128xf32> to vector<4x128xf32>
    %287 = vector.extract_strided_slice %275 {offsets = [8, 0], sizes = [4, 128], strides = [1, 1]} : vector<16x128xf32> to vector<4x128xf32>
    %288 = tpu.concatenate %285, %286, %287 in 1 : vector<4x128xf32>, vector<4x128xf32>, vector<4x128xf32> -> vector<4x384xf32>
    %289 = vector.extract_strided_slice %275 {offsets = [4, 0], sizes = [4, 128], strides = [1, 1]} : vector<16x128xf32> to vector<4x128xf32>
    %290 = vector.extract_strided_slice %275 {offsets = [8, 0], sizes = [4, 128], strides = [1, 1]} : vector<16x128xf32> to vector<4x128xf32>
    %291 = vector.extract_strided_slice %275 {offsets = [12, 0], sizes = [4, 128], strides = [1, 1]} : vector<16x128xf32> to vector<4x128xf32>
    %292 = tpu.concatenate %289, %290, %291 in 1 : vector<4x128xf32>, vector<4x128xf32>, vector<4x128xf32> -> vector<4x384xf32>
    %293 = vector.extract_strided_slice %275 {offsets = [8, 0], sizes = [4, 128], strides = [1, 1]} : vector<16x128xf32> to vector<4x128xf32>
    %294 = vector.extract_strided_slice %275 {offsets = [12, 0], sizes = [4, 128], strides = [1, 1]} : vector<16x128xf32> to vector<4x128xf32>
    %295 = vector.extract_strided_slice %275 {offsets = [0, 0], sizes = [4, 128], strides = [1, 1]} : vector<16x128xf32> to vector<4x128xf32>
    %cst_68 = arith.constant 0.000000e+00 : f32
    %296 = vector.broadcast %cst_68 : f32 to vector<1x128xf32>
    %297 = vector.extract_strided_slice %295 {offsets = [1, 0], sizes = [3, 128], strides = [1, 1]} : vector<4x128xf32> to vector<3x128xf32>
    %298 = tpu.concatenate %297, %296 in 0 : vector<3x128xf32>, vector<1x128xf32> -> vector<4x128xf32>
    %299 = tpu.concatenate %293, %294, %298 in 1 : vector<4x128xf32>, vector<4x128xf32>, vector<4x128xf32> -> vector<4x384xf32>
    %300 = tpu.concatenate %284, %288, %292, %299 in 0 : vector<4x384xf32>, vector<4x384xf32>, vector<4x384xf32>, vector<4x384xf32> -> vector<16x384xf32>
    %301 = arith.truncf %300 : vector<16x384xf32> to vector<16x384xbf16>
    %cst_69 = arith.constant dense<0.000000e+00> : vector<16x128xf32>
    %302 = tpu.matmul %301, %276, %cst_69 {dimension_numbers = #tpu.dot_dimension_numbers<[1], [0], [0], [1], [0, 0, 1, 1], [], []>} : vector<16x384xbf16>, vector<384x128xbf16>, vector<16x128xf32> -> vector<16x128xf32>
    %303 = vector.broadcast %277 : vector<1x128xf32> to vector<16x128xf32>
    %304 = arith.addf %302, %303 : vector<16x128xf32>
    %305 = arith.negf %304 : vector<16x128xf32>
    %306 = math.exp %305 : vector<16x128xf32>
    %cst_70 = arith.constant 1.000000e+00 : f32
    %307 = vector.broadcast %cst_70 : f32 to vector<16x128xf32>
    %308 = arith.addf %307, %306 : vector<16x128xf32>
    %309 = arith.divf %307, %308 : vector<16x128xf32>
    %c0_71 = arith.constant 0 : index
    %c0_72 = arith.constant 0 : index
    %c0_73 = arith.constant 0 : index
    %310 = vector.load %arg4[%c0_71, %c0_72, %c0_73] : memref<1x16x128xf32, #tpu.memory_space<vmem>>, vector<1x16x128xf32>
    %311 = vector.shape_cast %310 : vector<1x16x128xf32> to vector<16x128xf32>
    %312 = vector.shape_cast %309 : vector<16x128xf32> to vector<1x16x128xf32>
    tpu.vector_store %arg4[%c0_71, %c0_72, %c0_73], %312 {strides = array<i32>} : memref<1x16x128xf32, #tpu.memory_space<vmem>>, vector<1x16x128xf32>,
    return
  }
  func.func @transform_0(%arg0: i32) -> (i32, i32, i32) {
    %c0_i32 = arith.constant 0 : i32
    %c0_i32_0 = arith.constant 0 : i32
    %c0_i32_1 = arith.constant 0 : i32
    return %arg0, %c0_i32, %c0_i32_0 : i32, i32, i32
  }
  func.func @transform_1(%arg0: i32) -> (i32, i32) {
    %c0_i32 = arith.constant 0 : i32
    %c0_i32_0 = arith.constant 0 : i32
    %c0_i32_1 = arith.constant 0 : i32
    return %c0_i32, %c0_i32_0 : i32, i32
  }
  func.func @transform_2(%arg0: i32) -> (i32, i32) {
    %c0_i32 = arith.constant 0 : i32
    %c0_i32_0 = arith.constant 0 : i32
    %c0_i32_1 = arith.constant 0 : i32
    return %c0_i32, %c0_i32_0 : i32, i32
  }
  func.func @transform_3(%arg0: i32) -> (i32, i32, i32) {
    %c0_i32 = arith.constant 0 : i32
    %c0_i32_0 = arith.constant 0 : i32
    %c0_i32_1 = arith.constant 0 : i32
    return %arg0, %c0_i32, %c0_i32_0 : i32, i32, i32
  }
}

</mosaic_0001>

<llo_original>
// kernel: converter_forward.1
$region0: #{converter_forward.1}
  #allocation0 [shape = 'u32[]', space=smem, size = 0x4, offset = 0x4, fixed_abs, tag = 'smem constant byte address 0x4 - core index']
  #allocation1 [shape = 'u32[144,128]{1,0:T(1,128)}', space=vmem, size = 0x12000, scoped, tag = 'internal scratch']
  %s0 = inlined_call_operand.vmem [shape: bf16[2,4,32], index: 0, kind: input, shape index: {}]
  %s1 = inlined_call_operand.hbm [shape: bf16[1280,256], index: 1, kind: input, shape index: {}]
  %s2 = inlined_call_operand.vmem [shape: f32[1,1536], index: 2, kind: input, shape index: {}]
  %s3 = inlined_call_operand.vmem [shape: f32[2,16,128], index: 3, kind: output, shape index: {}]
  %s4 = sld [smem:[#allocation0]]
  $region49: #{converter_forward.1} parent=0
    _
  %s6 = ssub.s32 1, %s4
  %s7 = scalar_select 0, %s6, %s4
  $region1: #{converter_forward.1} parent=0
    #allocation2 [shape = 'u8[655360]{0}', space=vmem, size = 0xa0000, scoped, tag = 'input window, operand 1, single buffered']
    #allocation3 [shape = 's32[2]{0}', space=sflag, size = 0x8, scoped, tag = 'scoped memory for converter_forward.1']
    %8 = vsyncpa [#allocation3], 0
    loop: start=0, step=1, limit=4
    $region2: #{converter_forward.1} parent=1 // loop_pre_header
      _
    $region3: #{converter_forward.1} parent=1 // loop_header
      %s10 = sphi 0, %s14
      %p11 = scmp.ge.s32.totalorder %s10, 4
      %s20 = sphi 0, %s22
      %s23 = sphi 0, %s20
      %s24 = sphi 0, %s23
      %s40 = sphi 0, %s24
      %s44 = sphi 0, %s44
      %s46 = sphi 0, %s44
      %s47 = sphi 0, %s46
      %s61 = sphi 0, %s47
      %s65 = sphi 0, %s65
      %s67 = sphi 0, %s65
      %s68 = sphi 0, %s67
      %s82 = sphi 0, %s68
      %s88 = sphi 0, %s90
      %s91 = sphi 0, %s88
      %s92 = sphi 0, %s91
      %s108 = sphi 0, %s92
    $region4: #{converter_forward.1} parent=1 // loop_header_branch
      %13 = sbr.rel (%p11) target = $region8
    $region5: #{converter_forward.1} parent=1 // loop_body
      %s15 = ssub.s32 %s10, 1
      %s16 = ssub.s32 %s10, 2
      %s17 = sadd.s32 %s10, 1
      %s18 = ssub.s32 %s10, %s17
      %p19 = scmp.eq.s32.totalorder %s18, 0
      %s21 = sadd.s32 %s20, 1
      %s22 = scalar_select %p19, %s20, %s21
      %p25 = pneg %p19
      %p26 = scmp.eq.s32.totalorder %s10, 1
      %p27 = por %p25, %p26
      %p28 = scmp.ne.s32.totalorder %s20, %s23
      %p29 = scmp.eq.s32.totalorder %s10, 0
      %p30 = por %p28, %p29
      %p31 = scmp.ne.s32.totalorder %s20, %s23
      %p32 = scmp.eq.s32.totalorder %s15, 1
      %p33 = por %p31, %p32
      %p34 = scmp.ne.s32.totalorder %s23, %s24
      %p35 = scmp.eq.s32.totalorder %s15, 0
      %p36 = por %p34, %p35
      %p37 = scmp.ne.s32.totalorder %s23, %s24
      %p38 = scmp.eq.s32.totalorder %s16, 1
      %p39 = por %p37, %p38
      %p41 = scmp.ne.s32.totalorder %s24, %s40
      %p42 = scmp.eq.s32.totalorder %s16, 0
      %p43 = por %p41, %p42
      %s45 = sadd.s32 %s44, 1
      %p48 = scmp.eq.s32.totalorder %s10, 1
      %p49 = scmp.ne.s32.totalorder %s44, %s46
      %p50 = scmp.eq.s32.totalorder %s10, 0
      %p51 = por %p49, %p50
      %p52 = scmp.ne.s32.totalorder %s44, %s46
      %p53 = scmp.eq.s32.totalorder %s15, 1
      %p54 = por %p52, %p53
      %p55 = scmp.ne.s32.totalorder %s46, %s47
      %p56 = scmp.eq.s32.totalorder %s15, 0
      %p57 = por %p55, %p56
      %p58 = scmp.ne.s32.totalorder %s46, %s47
      %p59 = scmp.eq.s32.totalorder %s16, 1
      %p60 = por %p58, %p59
      %p62 = scmp.ne.s32.totalorder %s47, %s61
      %p63 = scmp.eq.s32.totalorder %s16, 0
      %p64 = por %p62, %p63
      %s66 = sadd.s32 %s65, 1
      %p69 = scmp.eq.s32.totalorder %s10, 1
      %p70 = scmp.ne.s32.totalorder %s65, %s67
      %p71 = scmp.eq.s32.totalorder %s10, 0
      %p72 = por %p70, %p71
      %p73 = scmp.ne.s32.totalorder %s65, %s67
      %p74 = scmp.eq.s32.totalorder %s15, 1
      %p75 = por %p73, %p74
      %p76 = scmp.ne.s32.totalorder %s67, %s68
      %p77 = scmp.eq.s32.totalorder %s15, 0
      %p78 = por %p76, %p77
      %p79 = scmp.ne.s32.totalorder %s67, %s68
      %p80 = scmp.eq.s32.totalorder %s16, 1
      %p81 = por %p79, %p80
      %p83 = scmp.ne.s32.totalorder %s68, %s82
      %p84 = scmp.eq.s32.totalorder %s16, 0
      %p85 = por %p83, %p84
      %s86 = ssub.s32 %s10, %s17
      %p87 = scmp.eq.s32.totalorder %s86, 0
      %s89 = sadd.s32 %s88, 1
      %s90 = scalar_select %p87, %s88, %s89
      %p93 = pneg %p87
      %p94 = scmp.eq.s32.totalorder %s10, 1
      %p95 = por %p93, %p94
      %p96 = scmp.ne.s32.totalorder %s88, %s91
      %p97 = scmp.eq.s32.totalorder %s10, 0
      %p98 = por %p96, %p97
      %p99 = scmp.ne.s32.totalorder %s88, %s91
      %p100 = scmp.eq.s32.totalorder %s15, 1
      %p101 = por %p99, %p100
      %p102 = scmp.ne.s32.totalorder %s91, %s92
      %p103 = scmp.eq.s32.totalorder %s15, 0
      %p104 = por %p102, %p103
      %p105 = scmp.ne.s32.totalorder %s91, %s92
      %p106 = scmp.eq.s32.totalorder %s16, 1
      %p107 = por %p105, %p106
      %p109 = scmp.ne.s32.totalorder %s92, %s108
      %p110 = scmp.eq.s32.totalorder %s16, 0
      %p111 = por %p109, %p110
      %p112 = scmp.le.s32.totalorder 1, %s10
      %p113 = scmp.lt.s32.totalorder %s10, 3
      %p114 = pnand %p112, %p113
      %p115 = pneg %p114
      // Predicated region
      $region9: #{converter_forward.1} parent=5 // pred_check
        _
      $region10: #{converter_forward.1} parent=5 // pred_check_branch
        %117 = sbr.rel (%p114) target = $region12
      $region11: #{converter_forward.1} parent=5 // pred_region
        %s118 = ssub.s32 %s10, 1
        // Predicated region
        $region13: #{converter_forward.1} parent=11 // pred_check
          %p119 = pneg %p57
        $region14: #{converter_forward.1} parent=11 // pred_check_branch
          %121 = sbr.rel (%p119) target = $region16
        $region15: #{converter_forward.1} parent=11 // pred_region
          %s123 = ssub.s32 20480, 20480
          %124 = vsyncadd [#allocation3], %s123
          %s125 = sshll.u32 [#allocation2], 4
          %s126 = int_to_ptr.vmem [resolvable:$true] %s125
          %131 = dma.hbm_to_vmem [thread:$0]  %s1, 20480, %s126, [#allocation3], 128, 128, 8
        $region16: #{converter_forward.1} parent=11 // pred_fallthru
          _
        // Predicated region
        $region17: #{converter_forward.1} parent=11 // pred_check
          %p132 = pneg %p78
        $region18: #{converter_forward.1} parent=11 // pred_check_branch
          %134 = sbr.rel (%p132) target = $region20
        $region19: #{converter_forward.1} parent=11 // pred_region
          _
        $region20: #{converter_forward.1} parent=11 // pred_fallthru
          _
      $region12: #{converter_forward.1} parent=5 // pred_fallthru
        _
      %p135 = scmp.lt.s32.totalorder %s10, 2
      // Predicated region
      $region21: #{converter_forward.1} parent=5 // pred_check
        %p136 = pneg %p135
      $region22: #{converter_forward.1} parent=5 // pred_check_branch
        %138 = sbr.rel (%p136) target = $region24
      $region23: #{converter_forward.1} parent=5 // pred_region
        // Predicated region
        $region25: #{converter_forward.1} parent=23 // pred_check
          %p139 = pneg %p30
        $region26: #{converter_forward.1} parent=23 // pred_check_branch
          %141 = sbr.rel (%p139) target = $region28
        $region27: #{converter_forward.1} parent=23 // pred_region
          %p142 = scmp.lt.s32.totalorder %s10, 1
          %s143 = scalar_select %p142, %s10, 1
          %s144 = smul.addr %s143, 2
          %s145 = scalar_lea.vmem %s0, %s144
        $region28: #{converter_forward.1} parent=23 // pred_fallthru
          _
      $region24: #{converter_forward.1} parent=5 // pred_fallthru
        _
      %p146 = scmp.le.s32.totalorder 1, %s10
      %p147 = scmp.lt.s32.totalorder %s10, 3
      %p148 = pnand %p146, %p147
      %p149 = pneg %p148
      // Predicated region
      $region29: #{converter_forward.1} parent=5 // pred_check
        _
      $region30: #{converter_forward.1} parent=5 // pred_check_branch
        %151 = sbr.rel (%p148) target = $region32
      $region31: #{converter_forward.1} parent=5 // pred_region
        %s152 = ssub.s32 %s10, 1
        // Predicated region
        $region33: #{converter_forward.1} parent=31 // pred_check
          %p153 = pneg %p57
        $region34: #{converter_forward.1} parent=31 // pred_check_branch
          %155 = sbr.rel (%p153) target = $region36
        $region35: #{converter_forward.1} parent=31 // pred_region
          %156 = dma.done [#allocation3], 20480
        $region36: #{converter_forward.1} parent=31 // pred_fallthru
          _
        %p157 = scmp.lt.s32.totalorder %s15, 1
        %s158 = scalar_select %p157, %s15, 1
        %s159 = smul.addr %s158, 2
        %s160 = scalar_lea.vmem %s0, %s159
        %p161 = pneg %p36
        %p162 = pneg %p33
        %p163 = pneg %p57
        %p164 = pneg %p54
        %p165 = pneg %p78
        %p166 = pneg %p75
        %p167 = pneg %p104
        %p168 = pneg %p101
        %p169 = scmp.lt.s32.totalorder %s15, 1
        %s170 = scalar_select %p169, %s15, 1
        %s171 = smul.addr %s170, 2
        %s172 = smul.addr %s171, 8
        %s173 = scalar_lea.vmem %s3, %s172
        %p174 = scmp.lt.s32.totalorder %s15, 1
        %s175 = scalar_select %p174, %s15, 1
        %s176 = smul.addr %s175, 2
        %s177 = scalar_lea.vmem %s0, %s176
        %p178 = scmp.lt.s32.totalorder %s15, 1
        %s179 = scalar_select %p178, %s15, 1
        %s180 = smul.addr %s179, 2
        %s181 = smul.addr %s180, 8
        %s182 = scalar_lea.vmem %s3, %s181
        %v184 = vld [vmem:[%s177] sm:$0x3]
        %v185 = vld [vmem:[#allocation2] sm:$0xf]
        %v186 = vld [vmem:[#allocation2 + $0x8] sm:$0xf]
        %v187 = vld [vmem:[#allocation2 + $0x10] sm:$0xf]
        %v188 = vld [vmem:[#allocation2 + $0x18] sm:$0xf]
        %v189 = vld [vmem:[%s2] sm:$0x1]
        %v191 = vlaneseq
        %v192 = vshrl.u32 %v191, 7
        %v193 = vsub.s32 0, %v192
        %v194 = vrot.slane %v189, %v193
        %v200 = vunpack.c.l.b16 %v185
        %v201 = vunpack.c.l.b16 %v186
        %v202 = vunpack.c.l.b16 %v187
        %v203 = vunpack.c.l.b16 %v188
        %v204 = vpack.c.b16 %v201, %v200
        %v205 = vpack.c.b16 %v203, %v202
        %vm208 = vcmask 261120
        %v210 = vsel %vm208, %v184, 0
        %212 = vmatprep.subr.bf16.mxu0 0
        %213 = vmatpush1.bf16.msra.mxu0 %v204
        %214 = vmatprep.subr.bf16.mxu0 0
        %215 = vmatpush1.bf16.msra.mxu0 %v205
        %216 = vmatprep.subr.bf16.mxu0 0
        %217 = vmatpush1.bf16.msra.mxu0 0
        %218 = vmatprep.subr.bf16.mxu0 0
        %219 = vmatpush1.bf16.msra.mxu0 0
        %220 = vmatprep.subr.bf16.mxu0 0
        %221 = vmatpush1.bf16.msra.mxu0 0
        %222 = vmatprep.subr.bf16.mxu0 0
        %223 = vmatpush1.bf16.msra.mxu0 0
        %224 = vmatprep.subr.bf16.mxu0 0
        %225 = vmatpush1.bf16.msra.mxu0 0
        %226 = vmatprep.subr.bf16.mxu0 0
        %227 = vmatpush1.bf16.msra.mxu0 0
        %228 = vmatprep.subr.bf16.mxu0 0
        %229 = vmatpush1.bf16.msra.mxu0 0
        %230 = vmatprep.subr.bf16.mxu0 0
        %231 = vmatpush1.bf16.msra.mxu0 0
        %232 = vmatprep.subr.bf16.mxu0 0
        %233 = vmatpush1.bf16.msra.mxu0 0
        %234 = vmatprep.subr.bf16.mxu0 0
        %235 = vmatpush1.bf16.msra.mxu0 0
        %236 = vmatprep.subr.bf16.mxu0 0
        %237 = vmatpush1.bf16.msra.mxu0 0
        %238 = vmatprep.subr.bf16.mxu0 0
        %239 = vmatpush1.bf16.msra.mxu0 0
        %240 = vmatprep.subr.bf16.mxu0 0
        %241 = vmatpush1.bf16.msra.mxu0 0
        %242 = vmatprep.subr.bf16.mxu0 0
        %243 = vmatpush1.bf16.msra.mxu0 0
        %244 = vmatprep.mubr.bf16.mxu0 0
        %245 = vmatmul.mubr.bf16.gmra.mrb[0].mxu0 %v210
        %v246 = vpop.f32.mrb[0].mxu0
        %v247 = vadd.f32 %v194, %v246
        %v248 = vpop.f32.mrb[0].mxu0
        %v249 = vpop.f32.mrb[0].mxu0
        %v250 = vpop.f32.mrb[0].mxu0
        %251 = vdwg.mxu0
        %v252 = vld [vmem:[#allocation2 + $0x20] sm:$0xf]
        %v253 = vld [vmem:[#allocation2 + $0x28] sm:$0xf]
        %v254 = vld [vmem:[#allocation2 + $0x30] sm:$0xf]
        %v255 = vld [vmem:[#allocation2 + $0x38] sm:$0xf]
        %v256 = vld [vmem:[#allocation2 + $0x40] sm:$0xf]
        %v257 = vld [vmem:[#allocation2 + $0x48] sm:$0xf]
        %v258 = vld [vmem:[#allocation2 + $0x50] sm:$0xf]
        %v259 = vld [vmem:[#allocation2 + $0x58] sm:$0xf]
        %v260 = vld [vmem:[#allocation2 + $0x60] sm:$0xf]
        %v261 = vld [vmem:[#allocation2 + $0x68] sm:$0xf]
        %v262 = vld [vmem:[#allocation2 + $0x70] sm:$0xf]
        %v263 = vld [vmem:[#allocation2 + $0x78] sm:$0xf]
        %v264 = vld [vmem:[%s2 + $0x1] sm:$0x1]
        %v266 = vrot.slane %v247, 7
        %vm268 = vcmask 1040384
        %v269 = vsel %vm268, 0.0, %v266
        %v270 = vrot.slane %v247, 1
        %vm272 = vcmask 1042432
        %v273 = vsel %vm272, %v270, 0.0
        %274 = vrot.lane.b32.xlu0 %v247, 32
        %v275 = vpop.permute.xlu0 %274
        %278 = vrot.lane.b32.xlu0 %v273, 64
        %v279 = vpop.permute.xlu0 %278
        %v281 = vsel %vm208, %v269, %v275
        %vm282 = vcmask 523264
        %v283 = vsel %vm282, %v281, %v279
        %v284 = vpack.c.bf16 %v283, %v283
        %v286 = vlaneseq
        %v287 = vshrl.u32 %v286, 7
        %v288 = vsub.s32 0, %v287
        %v289 = vrot.slane %v264, %v288
        %v303 = vunpack.c.l.b16 %v252
        %v304 = vunpack.c.l.b16 %v253
        %v305 = vunpack.c.l.b16 %v254
        %v306 = vunpack.c.l.b16 %v255
        %v307 = vunpack.c.l.b16 %v256
        %v308 = vunpack.c.l.b16 %v257
        %v309 = vunpack.c.l.b16 %v258
        %v310 = vunpack.c.l.b16 %v259
        %v311 = vunpack.c.l.b16 %v260
        %v312 = vunpack.c.l.b16 %v261
        %v313 = vunpack.c.l.b16 %v262
        %v314 = vunpack.c.l.b16 %v263
        %v315 = vpack.c.b16 %v304, %v303
        %v316 = vpack.c.b16 %v306, %v305
        %v317 = vpack.c.b16 %v308, %v307
        %v318 = vpack.c.b16 %v310, %v309
        %v319 = vpack.c.b16 %v312, %v311
        %v320 = vpack.c.b16 %v314, %v313
        %vm327 = vcmask 785408
        %v329 = vsel %vm327, %v284, 0
        %331 = vmatprep.subr.bf16.mxu0 0
        %332 = vmatpush1.bf16.msra.mxu0 %v315
        %333 = vmatprep.subr.bf16.mxu0 0
        %334 = vmatpush1.bf16.msra.mxu0 %v316
        %335 = vmatprep.subr.bf16.mxu0 0
        %336 = vmatpush1.bf16.msra.mxu0 %v317
        %337 = vmatprep.subr.bf16.mxu0 0
        %338 = vmatpush1.bf16.msra.mxu0 %v318
        %339 = vmatprep.subr.bf16.mxu0 0
        %340 = vmatpush1.bf16.msra.mxu0 %v319
        %341 = vmatprep.subr.bf16.mxu0 0
        %342 = vmatpush1.bf16.msra.mxu0 %v320
        %343 = vmatprep.subr.bf16.mxu0 0
        %344 = vmatpush1.bf16.msra.mxu0 0
        %345 = vmatprep.subr.bf16.mxu0 0
        %346 = vmatpush1.bf16.msra.mxu0 0
        %347 = vmatprep.subr.bf16.mxu0 0
        %348 = vmatpush1.bf16.msra.mxu0 0
        %349 = vmatprep.subr.bf16.mxu0 0
        %350 = vmatpush1.bf16.msra.mxu0 0
        %351 = vmatprep.subr.bf16.mxu0 0
        %352 = vmatpush1.bf16.msra.mxu0 0
        %353 = vmatprep.subr.bf16.mxu0 0
        %354 = vmatpush1.bf16.msra.mxu0 0
        %355 = vmatprep.subr.bf16.mxu0 0
        %356 = vmatpush1.bf16.msra.mxu0 0
        %357 = vmatprep.subr.bf16.mxu0 0
        %358 = vmatpush1.bf16.msra.mxu0 0
        %359 = vmatprep.subr.bf16.mxu0 0
        %360 = vmatpush1.bf16.msra.mxu0 0
        %361 = vmatprep.subr.bf16.mxu0 0
        %362 = vmatpush1.bf16.msra.mxu0 0
        %363 = vmatprep.mubr.bf16.mxu0 0
        %364 = vmatmul.mubr.bf16.gmra.mrb[0].mxu0 %v329
        %v365 = vpop.f32.mrb[0].mxu0
        %v366 = vadd.f32 %v289, %v365
        %v367 = vpop.f32.mrb[0].mxu0
        %v368 = vpop.f32.mrb[0].mxu0
        %v369 = vpop.f32.mrb[0].mxu0
        %370 = vdwg.mxu0
        %v371 = vxor.u32 %v366, 2147483648
        %v372 = vmul.f32 %v371, 1.442695
        %v373 = vpow.pop %v372
        %v374 = vadd.f32 %v373, 1.0
        %v375 = vrcp.pop %v374
        %v376 = vmul.f32 1.0, %v375
        %378 = vrot.lane.b32.xlu0 %v376, 96
        %v379 = vpop.permute.xlu0 %378
        %v381 = vmul.f32 %v366, %v379
        %v382 = vld [vmem:[#allocation2 + $0x80] sm:$0xf]
        %v383 = vld [vmem:[#allocation2 + $0x88] sm:$0xf]
        %v384 = vld [vmem:[#allocation2 + $0x90] sm:$0xf]
        %v385 = vld [vmem:[#allocation2 + $0x98] sm:$0xf]
        %v386 = vld [vmem:[#allocation2 + $0xa0] sm:$0xf]
        %v387 = vld [vmem:[#allocation2 + $0xa8] sm:$0xf]
        %v388 = vld [vmem:[#allocation2 + $0xb0] sm:$0xf]
        %v389 = vld [vmem:[#allocation2 + $0xb8] sm:$0xf]
        %v390 = vld [vmem:[#allocation2 + $0xc0] sm:$0xf]
        %v391 = vld [vmem:[#allocation2 + $0xc8] sm:$0xf]
        %v392 = vld [vmem:[#allocation2 + $0xd0] sm:$0xf]
        %v393 = vld [vmem:[#allocation2 + $0xd8] sm:$0xf]
        %v394 = vld [vmem:[%s2 + $0x2] sm:$0x1]
        %v396 = vrot.slane %v381, 6
        %vm398 = vcmask 1041408
        %v399 = vsel %vm398, 0.0, %v396
        %v400 = vrot.slane %v381, 2
        %v402 = vsel %vm398, %v400, 0.0
        %403 = vrot.lane.b32.xlu0 %v381, 32
        %v404 = vpop.permute.xlu0 %403
        %407 = vrot.lane.b32.xlu0 %v402, 64
        %v408 = vpop.permute.xlu0 %407
        %v410 = vsel %vm208, %v399, %v404
        %v411 = vsel %vm282, %v410, %v408
        %v412 = vpack.c.bf16 %v411, %v411
        %v414 = vlaneseq
        %v415 = vshrl.u32 %v414, 7
        %v416 = vsub.s32 0, %v415
        %v417 = vrot.slane %v394, %v416
        %v431 = vunpack.c.l.b16 %v382
        %v432 = vunpack.c.l.b16 %v383
        %v433 = vunpack.c.l.b16 %v384
        %v434 = vunpack.c.l.b16 %v385
        %v435 = vunpack.c.l.b16 %v386
        %v436 = vunpack.c.l.b16 %v387
        %v437 = vunpack.c.l.b16 %v388
        %v438 = vunpack.c.l.b16 %v389
        %v439 = vunpack.c.l.b16 %v390
        %v440 = vunpack.c.l.b16 %v391
        %v441 = vunpack.c.l.b16 %v392
        %v442 = vunpack.c.l.b16 %v393
        %v443 = vpack.c.b16 %v432, %v431
        %v444 = vpack.c.b16 %v434, %v433
        %v445 = vpack.c.b16 %v436, %v435
        %v446 = vpack.c.b16 %v438, %v437
        %v447 = vpack.c.b16 %v440, %v439
        %v448 = vpack.c.b16 %v442, %v441
        %v456 = vsel %vm327, %v412, 0
        %458 = vmatprep.subr.bf16.mxu0 0
        %459 = vmatpush1.bf16.msra.mxu0 %v443
        %460 = vmatprep.subr.bf16.mxu0 0
        %461 = vmatpush1.bf16.msra.mxu0 %v444
        %462 = vmatprep.subr.bf16.mxu0 0
        %463 = vmatpush1.bf16.msra.mxu0 %v445
        %464 = vmatprep.subr.bf16.mxu0 0
        %465 = vmatpush1.bf16.msra.mxu0 %v446
        %466 = vmatprep.subr.bf16.mxu0 0
        %467 = vmatpush1.bf16.msra.mxu0 %v447
        %468 = vmatprep.subr.bf16.mxu0 0
        %469 = vmatpush1.bf16.msra.mxu0 %v448
        %470 = vmatprep.subr.bf16.mxu0 0
        %471 = vmatpush1.bf16.msra.mxu0 0
        %472 = vmatprep.subr.bf16.mxu0 0
        %473 = vmatpush1.bf16.msra.mxu0 0
        %474 = vmatprep.subr.bf16.mxu0 0
        %475 = vmatpush1.bf16.msra.mxu0 0
        %476 = vmatprep.subr.bf16.mxu0 0
        %477 = vmatpush1.bf16.msra.mxu0 0
        %478 = vmatprep.subr.bf16.mxu0 0
        %479 = vmatpush1.bf16.msra.mxu0 0
        %480 = vmatprep.subr.bf16.mxu0 0
        %481 = vmatpush1.bf16.msra.mxu0 0
        %482 = vmatprep.subr.bf16.mxu0 0
        %483 = vmatpush1.bf16.msra.mxu0 0
        %484 = vmatprep.subr.bf16.mxu0 0
        %485 = vmatpush1.bf16.msra.mxu0 0
        %486 = vmatprep.subr.bf16.mxu0 0
        %487 = vmatpush1.bf16.msra.mxu0 0
        %488 = vmatprep.subr.bf16.mxu0 0
        %489 = vmatpush1.bf16.msra.mxu0 0
        %490 = vmatprep.mubr.bf16.mxu0 0
        %491 = vmatmul.mubr.bf16.gmra.mrb[0].mxu0 %v456
        %v492 = vpop.f32.mrb[0].mxu0
        %v493 = vadd.f32 %v417, %v492
        %v494 = vpop.f32.mrb[0].mxu0
        %v495 = vpop.f32.mrb[0].mxu0
        %v496 = vpop.f32.mrb[0].mxu0
        %497 = vdwg.mxu0
        %v498 = vxor.u32 %v493, 2147483648
        %v499 = vmul.f32 %v498, 1.442695
        %v500 = vpow.pop %v499
        %v501 = vadd.f32 %v500, 1.0
        %v502 = vrcp.pop %v501
        %v503 = vmul.f32 1.0, %v502
        %505 = vrot.lane.b32.xlu0 %v503, 96
        %v506 = vpop.permute.xlu0 %505
        %v508 = vmul.f32 %v493, %v506
        %v509 = vld [vmem:[#allocation2 + $0xe0] sm:$0xf]
        %v510 = vld [vmem:[#allocation2 + $0xe8] sm:$0xf]
        %v511 = vld [vmem:[#allocation2 + $0xf0] sm:$0xf]
        %v512 = vld [vmem:[#allocation2 + $0xf8] sm:$0xf]
        %v513 = vld [vmem:[#allocation2 + $0x100] sm:$0xf]
        %v514 = vld [vmem:[#allocation2 + $0x108] sm:$0xf]
        %v515 = vld [vmem:[#allocation2 + $0x110] sm:$0xf]
        %v516 = vld [vmem:[#allocation2 + $0x118] sm:$0xf]
        %v517 = vld [vmem:[#allocation2 + $0x120] sm:$0xf]
        %v518 = vld [vmem:[#allocation2 + $0x128] sm:$0xf]
        %v519 = vld [vmem:[#allocation2 + $0x130] sm:$0xf]
        %v520 = vld [vmem:[#allocation2 + $0x138] sm:$0xf]
        %v521 = vld [vmem:[%s2 + $0x3] sm:$0x1]
        %v523 = vrot.slane %v508, 7
        %v525 = vsel %vm268, 0.0, %v523
        %v526 = vrot.slane %v508, 1
        %v528 = vsel %vm272, %v526, 0.0
        %530 = vrot.lane.b32.xlu0 %v525, 32
        %v531 = vpop.permute.xlu0 %530
        %534 = vrot.lane.b32.xlu0 %v528, 64
        %v535 = vpop.permute.xlu0 %534
        %v537 = vsel %vm208, %v508, %v531
        %v538 = vsel %vm282, %v537, %v535
        %v539 = vpack.c.bf16 %v538, %v538
        %v541 = vlaneseq
        %v542 = vshrl.u32 %v541, 7
        %v543 = vsub.s32 0, %v542
        %v544 = vrot.slane %v521, %v543
        %v558 = vunpack.c.l.b16 %v509
        %v559 = vunpack.c.l.b16 %v510
        %v560 = vunpack.c.l.b16 %v511
        %v561 = vunpack.c.l.b16 %v512
        %v562 = vunpack.c.l.b16 %v513
        %v563 = vunpack.c.l.b16 %v514
        %v564 = vunpack.c.l.b16 %v515
        %v565 = vunpack.c.l.b16 %v516
        %v566 = vunpack.c.l.b16 %v517
        %v567 = vunpack.c.l.b16 %v518
        %v568 = vunpack.c.l.b16 %v519
        %v569 = vunpack.c.l.b16 %v520
        %v570 = vpack.c.b16 %v559, %v558
        %v571 = vpack.c.b16 %v561, %v560
        %v572 = vpack.c.b16 %v563, %v562
        %v573 = vpack.c.b16 %v565, %v564
        %v574 = vpack.c.b16 %v567, %v566
        %v575 = vpack.c.b16 %v569, %v568
        %v583 = vsel %vm327, %v539, 0
        %585 = vmatprep.subr.bf16.mxu0 0
        %586 = vmatpush1.bf16.msra.mxu0 %v570
        %587 = vmatprep.subr.bf16.mxu0 0
        %588 = vmatpush1.bf16.msra.mxu0 %v571
        %589 = vmatprep.subr.bf16.mxu0 0
        %590 = vmatpush1.bf16.msra.mxu0 %v572
        %591 = vmatprep.subr.bf16.mxu0 0
        %592 = vmatpush1.bf16.msra.mxu0 %v573
        %593 = vmatprep.subr.bf16.mxu0 0
        %594 = vmatpush1.bf16.msra.mxu0 %v574
        %595 = vmatprep.subr.bf16.mxu0 0
        %596 = vmatpush1.bf16.msra.mxu0 %v575
        %597 = vmatprep.subr.bf16.mxu0 0
        %598 = vmatpush1.bf16.msra.mxu0 0
        %599 = vmatprep.subr.bf16.mxu0 0
        %600 = vmatpush1.bf16.msra.mxu0 0
        %601 = vmatprep.subr.bf16.mxu0 0
        %602 = vmatpush1.bf16.msra.mxu0 0
        %603 = vmatprep.subr.bf16.mxu0 0
        %604 = vmatpush1.bf16.msra.mxu0 0
        %605 = vmatprep.subr.bf16.mxu0 0
        %606 = vmatpush1.bf16.msra.mxu0 0
        %607 = vmatprep.subr.bf16.mxu0 0
        %608 = vmatpush1.bf16.msra.mxu0 0
        %609 = vmatprep.subr.bf16.mxu0 0
        %610 = vmatpush1.bf16.msra.mxu0 0
        %611 = vmatprep.subr.bf16.mxu0 0
        %612 = vmatpush1.bf16.msra.mxu0 0
        %613 = vmatprep.subr.bf16.mxu0 0
        %614 = vmatpush1.bf16.msra.mxu0 0
        %615 = vmatprep.subr.bf16.mxu0 0
        %616 = vmatpush1.bf16.msra.mxu0 0
        %617 = vmatprep.mubr.bf16.mxu0 0
        %618 = vmatmul.mubr.bf16.gmra.mrb[0].mxu0 %v583
        %v619 = vpop.f32.mrb[0].mxu0
        %v620 = vadd.f32 %v544, %v619
        %v621 = vpop.f32.mrb[0].mxu0
        %v622 = vpop.f32.mrb[0].mxu0
        %v623 = vpop.f32.mrb[0].mxu0
        %624 = vdwg.mxu0
        %v626 = vrot.slane %v620, 4
        %627 = vrot.lane.b32.xlu0 %v626, 96
        %v628 = vpop.permute.xlu0 %627
        %vm630 = vcmask 1043456
        %v631 = vsel %vm630, %v620, %v628
        %v632 = vld [vmem:[#allocation2 + $0x140] sm:$0xf]
        %v633 = vld [vmem:[#allocation2 + $0x148] sm:$0xf]
        %v634 = vld [vmem:[#allocation2 + $0x150] sm:$0xf]
        %v635 = vld [vmem:[#allocation2 + $0x158] sm:$0xf]
        %v636 = vld [vmem:[#allocation2 + $0x160] sm:$0xf]
        %v637 = vld [vmem:[#allocation2 + $0x168] sm:$0xf]
        %v638 = vld [vmem:[#allocation2 + $0x170] sm:$0xf]
        %v639 = vld [vmem:[#allocation2 + $0x178] sm:$0xf]
        %v640 = vld [vmem:[#allocation2 + $0x180] sm:$0xf]
        %v641 = vld [vmem:[#allocation2 + $0x188] sm:$0xf]
        %v642 = vld [vmem:[#allocation2 + $0x190] sm:$0xf]
        %v643 = vld [vmem:[#allocation2 + $0x198] sm:$0xf]
        %v644 = vld [vmem:[%s2 + $0x4] sm:$0x1]
        %v646 = vrot.slane %v631, 3
        %v648 = vsel %vm268, 0.0, %v646
        %649 = vrot.lane.b32.xlu0 %v631, 32
        %v650 = vpop.permute.xlu0 %649
        %v652 = vrot.slane %v631, 4
        %653 = vrot.lane.b32.xlu0 %v652, 64
        %v654 = vpop.permute.xlu0 %653
        %v656 = vsel %vm208, %v648, %v650
        %v657 = vsel %vm282, %v656, %v654
        %v658 = vrot.slane %v631, 1
        %v660 = vsel %vm272, %v658, 0.0
        %661 = vrot.lane.b32.xlu0 %v652, 32
        %v662 = vpop.permute.xlu0 %661
        %665 = vrot.lane.b32.xlu0 %v660, 64
        %v666 = vpop.permute.xlu0 %665
        %v668 = vsel %vm208, %v631, %v662
        %v669 = vsel %vm282, %v668, %v666
        %v671 = vrot.slane %v669, 4
        %v673 = vsel %vm630, %v657, %v671
        %v674 = vpack.c.bf16 %v673, %v673
        %v676 = vlaneseq
        %v677 = vshrl.u32 %v676, 7
        %v678 = vsub.s32 0, %v677
        %v679 = vrot.slane %v644, %v678
        %v693 = vunpack.c.l.b16 %v632
        %v694 = vunpack.c.l.b16 %v633
        %v695 = vunpack.c.l.b16 %v634
        %v696 = vunpack.c.l.b16 %v635
        %v697 = vunpack.c.l.b16 %v636
        %v698 = vunpack.c.l.b16 %v637
        %v699 = vunpack.c.l.b16 %v638
        %v700 = vunpack.c.l.b16 %v639
        %v701 = vunpack.c.l.b16 %v640
        %v702 = vunpack.c.l.b16 %v641
        %v703 = vunpack.c.l.b16 %v642
        %v704 = vunpack.c.l.b16 %v643
        %v705 = vpack.c.b16 %v694, %v693
        %v706 = vpack.c.b16 %v696, %v695
        %v707 = vpack.c.b16 %v698, %v697
        %v708 = vpack.c.b16 %v700, %v699
        %v709 = vpack.c.b16 %v702, %v701
        %v710 = vpack.c.b16 %v704, %v703
        %v718 = vsel %vm327, %v674, 0
        %720 = vmatprep.subr.bf16.mxu0 0
        %721 = vmatpush1.bf16.msra.mxu0 %v705
        %722 = vmatprep.subr.bf16.mxu0 0
        %723 = vmatpush1.bf16.msra.mxu0 %v706
        %724 = vmatprep.subr.bf16.mxu0 0
        %725 = vmatpush1.bf16.msra.mxu0 %v707
        %726 = vmatprep.subr.bf16.mxu0 0
        %727 = vmatpush1.bf16.msra.mxu0 %v708
        %728 = vmatprep.subr.bf16.mxu0 0
        %729 = vmatpush1.bf16.msra.mxu0 %v709
        %730 = vmatprep.subr.bf16.mxu0 0
        %731 = vmatpush1.bf16.msra.mxu0 %v710
        %732 = vmatprep.subr.bf16.mxu0 0
        %733 = vmatpush1.bf16.msra.mxu0 0
        %734 = vmatprep.subr.bf16.mxu0 0
        %735 = vmatpush1.bf16.msra.mxu0 0
        %736 = vmatprep.subr.bf16.mxu0 0
        %737 = vmatpush1.bf16.msra.mxu0 0
        %738 = vmatprep.subr.bf16.mxu0 0
        %739 = vmatpush1.bf16.msra.mxu0 0
        %740 = vmatprep.subr.bf16.mxu0 0
        %741 = vmatpush1.bf16.msra.mxu0 0
        %742 = vmatprep.subr.bf16.mxu0 0
        %743 = vmatpush1.bf16.msra.mxu0 0
        %744 = vmatprep.subr.bf16.mxu0 0
        %745 = vmatpush1.bf16.msra.mxu0 0
        %746 = vmatprep.subr.bf16.mxu0 0
        %747 = vmatpush1.bf16.msra.mxu0 0
        %748 = vmatprep.subr.bf16.mxu0 0
        %749 = vmatpush1.bf16.msra.mxu0 0
        %750 = vmatprep.subr.bf16.mxu0 0
        %751 = vmatpush1.bf16.msra.mxu0 0
        %752 = vmatprep.mubr.bf16.mxu0 0
        %753 = vmatmul.mubr.bf16.gmra.mrb[0].mxu0 %v718
        %v754 = vpop.f32.mrb[0].mxu0
        %v755 = vadd.f32 %v679, %v754
        %v756 = vpop.f32.mrb[0].mxu0
        %v757 = vpop.f32.mrb[0].mxu0
        %v758 = vpop.f32.mrb[0].mxu0
        %759 = vdwg.mxu0
        %v760 = vxor.u32 %v755, 2147483648
        %v761 = vmul.f32 %v760, 1.442695
        %v762 = vpow.pop %v761
        %v763 = vadd.f32 %v762, 1.0
        %v764 = vrcp.pop %v763
        %v765 = vmul.f32 1.0, %v764
        %767 = vrot.lane.b32.xlu0 %v765, 96
        %v768 = vpop.permute.xlu0 %767
        %v770 = vmul.f32 %v755, %v768
        %v771 = vld [vmem:[#allocation2 + $0x1a0] sm:$0xf]
        %v772 = vld [vmem:[#allocation2 + $0x1a8] sm:$0xf]
        %v773 = vld [vmem:[#allocation2 + $0x1b0] sm:$0xf]
        %v774 = vld [vmem:[#allocation2 + $0x1b8] sm:$0xf]
        %v775 = vld [vmem:[#allocation2 + $0x1c0] sm:$0xf]
        %v776 = vld [vmem:[#allocation2 + $0x1c8] sm:$0xf]
        %v777 = vld [vmem:[#allocation2 + $0x1d0] sm:$0xf]
        %v778 = vld [vmem:[#allocation2 + $0x1d8] sm:$0xf]
        %v779 = vld [vmem:[#allocation2 + $0x1e0] sm:$0xf]
        %v780 = vld [vmem:[#allocation2 + $0x1e8] sm:$0xf]
        %v781 = vld [vmem:[#allocation2 + $0x1f0] sm:$0xf]
        %v782 = vld [vmem:[#allocation2 + $0x1f8] sm:$0xf]
        %v783 = vld [vmem:[%s2 + $0x5] sm:$0x1]
        %v785 = vrot.slane %v770, 7
        %v787 = vsel %vm268, 0.0, %v785
        %v788 = vrot.slane %v770, 1
        %v790 = vsel %vm272, %v788, 0.0
        %791 = vrot.lane.b32.xlu0 %v770, 32
        %v792 = vpop.permute.xlu0 %791
        %795 = vrot.lane.b32.xlu0 %v790, 64
        %v796 = vpop.permute.xlu0 %795
        %v798 = vsel %vm208, %v787, %v792
        %v799 = vsel %vm282, %v798, %v796
        %v800 = vrot.slane %v770, 3
        %v802 = vsel %vm268, 0.0, %v800
        %v803 = vrot.slane %v770, 5
        %v805 = vsel %vm272, %v803, 0.0
        %v806 = vrot.slane %v770, 4
        %807 = vrot.lane.b32.xlu0 %v806, 32
        %v808 = vpop.permute.xlu0 %807
        %811 = vrot.lane.b32.xlu0 %v805, 64
        %v812 = vpop.permute.xlu0 %811
        %v814 = vsel %vm208, %v802, %v808
        %v815 = vsel %vm282, %v814, %v812
        %v817 = vrot.slane %v815, 4
        %v819 = vsel %vm630, %v799, %v817
        %v820 = vpack.c.bf16 %v819, %v819
        %v822 = vlaneseq
        %v823 = vshrl.u32 %v822, 7
        %v824 = vsub.s32 0, %v823
        %v825 = vrot.slane %v783, %v824
        %v839 = vunpack.c.l.b16 %v771
        %v840 = vunpack.c.l.b16 %v772
        %v841 = vunpack.c.l.b16 %v773
        %v842 = vunpack.c.l.b16 %v774
        %v843 = vunpack.c.l.b16 %v775
        %v844 = vunpack.c.l.b16 %v776
        %v845 = vunpack.c.l.b16 %v777
        %v846 = vunpack.c.l.b16 %v778
        %v847 = vunpack.c.l.b16 %v779
        %v848 = vunpack.c.l.b16 %v780
        %v849 = vunpack.c.l.b16 %v781
        %v850 = vunpack.c.l.b16 %v782
        %v851 = vpack.c.b16 %v840, %v839
        %v852 = vpack.c.b16 %v842, %v841
        %v853 = vpack.c.b16 %v844, %v843
        %v854 = vpack.c.b16 %v846, %v845
        %v855 = vpack.c.b16 %v848, %v847
        %v856 = vpack.c.b16 %v850, %v849
        %v864 = vsel %vm327, %v820, 0
        %866 = vmatprep.subr.bf16.mxu0 0
        %867 = vmatpush1.bf16.msra.mxu0 %v851
        %868 = vmatprep.subr.bf16.mxu0 0
        %869 = vmatpush1.bf16.msra.mxu0 %v852
        %870 = vmatprep.subr.bf16.mxu0 0
        %871 = vmatpush1.bf16.msra.mxu0 %v853
        %872 = vmatprep.subr.bf16.mxu0 0
        %873 = vmatpush1.bf16.msra.mxu0 %v854
        %874 = vmatprep.subr.bf16.mxu0 0
        %875 = vmatpush1.bf16.msra.mxu0 %v855
        %876 = vmatprep.subr.bf16.mxu0 0
        %877 = vmatpush1.bf16.msra.mxu0 %v856
        %878 = vmatprep.subr.bf16.mxu0 0
        %879 = vmatpush1.bf16.msra.mxu0 0
        %880 = vmatprep.subr.bf16.mxu0 0
        %881 = vmatpush1.bf16.msra.mxu0 0
        %882 = vmatprep.subr.bf16.mxu0 0
        %883 = vmatpush1.bf16.msra.mxu0 0
        %884 = vmatprep.subr.bf16.mxu0 0
        %885 = vmatpush1.bf16.msra.mxu0 0
        %886 = vmatprep.subr.bf16.mxu0 0
        %887 = vmatpush1.bf16.msra.mxu0 0
        %888 = vmatprep.subr.bf16.mxu0 0
        %889 = vmatpush1.bf16.msra.mxu0 0
        %890 = vmatprep.subr.bf16.mxu0 0
        %891 = vmatpush1.bf16.msra.mxu0 0
        %892 = vmatprep.subr.bf16.mxu0 0
        %893 = vmatpush1.bf16.msra.mxu0 0
        %894 = vmatprep.subr.bf16.mxu0 0
        %895 = vmatpush1.bf16.msra.mxu0 0
        %896 = vmatprep.subr.bf16.mxu0 0
        %897 = vmatpush1.bf16.msra.mxu0 0
        %898 = vmatprep.mubr.bf16.mxu0 0
        %899 = vmatmul.mubr.bf16.gmra.mrb[0].mxu0 %v864
        %v900 = vpop.f32.mrb[0].mxu0
        %v901 = vadd.f32 %v825, %v900
        %v902 = vpop.f32.mrb[0].mxu0
        %v903 = vpop.f32.mrb[0].mxu0
        %v904 = vpop.f32.mrb[0].mxu0
        %905 = vdwg.mxu0
        %v906 = vxor.u32 %v901, 2147483648
        %v907 = vmul.f32 %v906, 1.442695
        %v908 = vpow.pop %v907
        %v909 = vadd.f32 %v908, 1.0
        %v910 = vrcp.pop %v909
        %v911 = vmul.f32 1.0, %v910
        %913 = vrot.lane.b32.xlu0 %v911, 96
        %v914 = vpop.permute.xlu0 %913
        %v916 = vmul.f32 %v901, %v914
        %v917 = vld [vmem:[#allocation2 + $0x200] sm:$0xf]
        %v918 = vld [vmem:[#allocation2 + $0x208] sm:$0xf]
        %v919 = vld [vmem:[#allocation2 + $0x210] sm:$0xf]
        %v920 = vld [vmem:[#allocation2 + $0x218] sm:$0xf]
        %v921 = vld [vmem:[#allocation2 + $0x220] sm:$0xf]
        %v922 = vld [vmem:[#allocation2 + $0x228] sm:$0xf]
        %v923 = vld [vmem:[#allocation2 + $0x230] sm:$0xf]
        %v924 = vld [vmem:[#allocation2 + $0x238] sm:$0xf]
        %v925 = vld [vmem:[#allocation2 + $0x240] sm:$0xf]
        %v926 = vld [vmem:[#allocation2 + $0x248] sm:$0xf]
        %v927 = vld [vmem:[#allocation2 + $0x250] sm:$0xf]
        %v928 = vld [vmem:[#allocation2 + $0x258] sm:$0xf]
        %v929 = vld [vmem:[%s2 + $0x6] sm:$0x1]
        %v931 = vrot.slane %v916, 3
        %v933 = vsel %vm268, 0.0, %v931
        %935 = vrot.lane.b32.xlu0 %v933, 32
        %v936 = vpop.permute.xlu0 %935
        %v938 = vrot.slane %v916, 4
        %939 = vrot.lane.b32.xlu0 %v938, 64
        %v940 = vpop.permute.xlu0 %939
        %v942 = vsel %vm208, %v916, %v936
        %v943 = vsel %vm282, %v942, %v940
        %v944 = vrot.slane %v916, 1
        %v946 = vsel %vm272, %v944, 0.0
        %947 = vrot.lane.b32.xlu0 %v938, 32
        %v948 = vpop.permute.xlu0 %947
        %v951 = vrot.slane %v946, 4
        %952 = vrot.lane.b32.xlu0 %v951, 64
        %v953 = vpop.permute.xlu0 %952
        %v955 = vsel %vm208, %v916, %v948
        %v956 = vsel %vm282, %v955, %v953
        %v957 = vsel %vm630, %v943, %v956
        %v958 = vpack.c.bf16 %v957, %v957
        %v960 = vlaneseq
        %v961 = vshrl.u32 %v960, 7
        %v962 = vsub.s32 0, %v961
        %v963 = vrot.slane %v929, %v962
        %v977 = vunpack.c.l.b16 %v917
        %v978 = vunpack.c.l.b16 %v918
        %v979 = vunpack.c.l.b16 %v919
        %v980 = vunpack.c.l.b16 %v920
        %v981 = vunpack.c.l.b16 %v921
        %v982 = vunpack.c.l.b16 %v922
        %v983 = vunpack.c.l.b16 %v923
        %v984 = vunpack.c.l.b16 %v924
        %v985 = vunpack.c.l.b16 %v925
        %v986 = vunpack.c.l.b16 %v926
        %v987 = vunpack.c.l.b16 %v927
        %v988 = vunpack.c.l.b16 %v928
        %v989 = vpack.c.b16 %v978, %v977
        %v990 = vpack.c.b16 %v980, %v979
        %v991 = vpack.c.b16 %v982, %v981
        %v992 = vpack.c.b16 %v984, %v983
        %v993 = vpack.c.b16 %v986, %v985
        %v994 = vpack.c.b16 %v988, %v987
        %v1002 = vsel %vm327, %v958, 0
        %1004 = vmatprep.subr.bf16.mxu0 0
        %1005 = vmatpush1.bf16.msra.mxu0 %v989
        %1006 = vmatprep.subr.bf16.mxu0 0
        %1007 = vmatpush1.bf16.msra.mxu0 %v990
        %1008 = vmatprep.subr.bf16.mxu0 0
        %1009 = vmatpush1.bf16.msra.mxu0 %v991
        %1010 = vmatprep.subr.bf16.mxu0 0
        %1011 = vmatpush1.bf16.msra.mxu0 %v992
        %1012 = vmatprep.subr.bf16.mxu0 0
        %1013 = vmatpush1.bf16.msra.mxu0 %v993
        %1014 = vmatprep.subr.bf16.mxu0 0
        %1015 = vmatpush1.bf16.msra.mxu0 %v994
        %1016 = vmatprep.subr.bf16.mxu0 0
        %1017 = vmatpush1.bf16.msra.mxu0 0
        %1018 = vmatprep.subr.bf16.mxu0 0
        %1019 = vmatpush1.bf16.msra.mxu0 0
        %1020 = vmatprep.subr.bf16.mxu0 0
        %1021 = vmatpush1.bf16.msra.mxu0 0
        %1022 = vmatprep.subr.bf16.mxu0 0
        %1023 = vmatpush1.bf16.msra.mxu0 0
        %1024 = vmatprep.subr.bf16.mxu0 0
        %1025 = vmatpush1.bf16.msra.mxu0 0
        %1026 = vmatprep.subr.bf16.mxu0 0
        %1027 = vmatpush1.bf16.msra.mxu0 0
        %1028 = vmatprep.subr.bf16.mxu0 0
        %1029 = vmatpush1.bf16.msra.mxu0 0
        %1030 = vmatprep.subr.bf16.mxu0 0
        %1031 = vmatpush1.bf16.msra.mxu0 0
        %1032 = vmatprep.subr.bf16.mxu0 0
        %1033 = vmatpush1.bf16.msra.mxu0 0
        %1034 = vmatprep.subr.bf16.mxu0 0
        %1035 = vmatpush1.bf16.msra.mxu0 0
        %1036 = vmatprep.mubr.bf16.mxu0 0
        %1037 = vmatmul.mubr.bf16.gmra.mrb[0].mxu0 %v1002
        %v1038 = vpop.f32.mrb[0].mxu0
        %v1039 = vadd.f32 %v963, %v1038
        %v1040 = vpop.f32.mrb[0].mxu0
        %v1041 = vpop.f32.mrb[0].mxu0
        %v1042 = vpop.f32.mrb[0].mxu0
        %1043 = vdwg.mxu0
        %v1045 = vrot.slane %v1039, 4
        %1046 = vrot.lane.b32.xlu0 %v1045, 96
        %v1047 = vpop.permute.xlu0 %1046
        %1050 = vrot.lane.b32.xlu0 %v1039, 96
        %v1051 = vpop.permute.xlu0 %1050
        %v1053 = vsel %vm630, %v1039, %v1047
        %v1054 = vsel %vm630, %v1045, %v1051
        %v1055 = vld [vmem:[#allocation2 + $0x260] sm:$0xf]
        %v1056 = vld [vmem:[#allocation2 + $0x268] sm:$0xf]
        %v1057 = vld [vmem:[#allocation2 + $0x270] sm:$0xf]
        %v1058 = vld [vmem:[#allocation2 + $0x278] sm:$0xf]
        %v1059 = vld [vmem:[#allocation2 + $0x280] sm:$0xf]
        %v1060 = vld [vmem:[#allocation2 + $0x288] sm:$0xf]
        %v1061 = vld [vmem:[#allocation2 + $0x290] sm:$0xf]
        %v1062 = vld [vmem:[#allocation2 + $0x298] sm:$0xf]
        %v1063 = vld [vmem:[#allocation2 + $0x2a0] sm:$0xf]
        %v1064 = vld [vmem:[#allocation2 + $0x2a8] sm:$0xf]
        %v1065 = vld [vmem:[#allocation2 + $0x2b0] sm:$0xf]
        %v1066 = vld [vmem:[#allocation2 + $0x2b8] sm:$0xf]
        %v1067 = vld [vmem:[%s2 + $0x7] sm:$0x1]
        %v1069 = vrot.slane %v1054, 3
        %v1071 = vsel %vm268, 0.0, %v1069
        %1073 = vrot.lane.b32.xlu0 %v1053, 32
        %v1074 = vpop.permute.xlu0 %1073
        %v1076 = vrot.slane %v1053, 4
        %1077 = vrot.lane.b32.xlu0 %v1076, 64
        %v1078 = vpop.permute.xlu0 %1077
        %v1080 = vsel %vm208, %v1071, %v1074
        %v1081 = vsel %vm282, %v1080, %v1078
        %1082 = vrot.lane.b32.xlu0 %v1076, 32
        %v1083 = vpop.permute.xlu0 %1082
        %1085 = vrot.lane.b32.xlu0 %v1054, 64
        %v1086 = vpop.permute.xlu0 %1085
        %v1088 = vsel %vm208, %v1053, %v1083
        %v1089 = vsel %vm282, %v1088, %v1086
        %v1090 = vrot.slane %v1054, 4
        %1091 = vrot.lane.b32.xlu0 %v1090, 32
        %v1092 = vpop.permute.xlu0 %1091
        %v1094 = vsel %vm208, %v1053, %v1092
        %v1095 = vsel %vm282, %v1094, %v1086
        %v1096 = vrot.slane %v1053, 1
        %v1098 = vsel %vm272, %v1096, 0.0
        %1100 = vrot.lane.b32.xlu0 %v1098, 64
        %v1101 = vpop.permute.xlu0 %1100
        %v1103 = vsel %vm208, %v1054, %v1092
        %v1104 = vsel %vm282, %v1103, %v1101
        %v1106 = vrot.slane %v1089, 4
        %v1109 = vrot.slane %v1095, 4
        %v1112 = vrot.slane %v1104, 4
        %v1114 = vsel %vm630, %v1081, %v1106
        %v1115 = vsel %vm630, %v1109, %v1112
        %v1116 = vpack.c.bf16 %v1115, %v1114
        %v1118 = vlaneseq
        %v1119 = vshrl.u32 %v1118, 7
        %v1120 = vsub.s32 0, %v1119
        %v1121 = vrot.slane %v1067, %v1120
        %v1135 = vunpack.c.l.b16 %v1055
        %v1136 = vunpack.c.l.b16 %v1056
        %v1137 = vunpack.c.l.b16 %v1057
        %v1138 = vunpack.c.l.b16 %v1058
        %v1139 = vunpack.c.l.b16 %v1059
        %v1140 = vunpack.c.l.b16 %v1060
        %v1141 = vunpack.c.l.b16 %v1061
        %v1142 = vunpack.c.l.b16 %v1062
        %v1143 = vunpack.c.l.b16 %v1063
        %v1144 = vunpack.c.l.b16 %v1064
        %v1145 = vunpack.c.l.b16 %v1065
        %v1146 = vunpack.c.l.b16 %v1066
        %v1147 = vpack.c.b16 %v1136, %v1135
        %v1148 = vpack.c.b16 %v1138, %v1137
        %v1149 = vpack.c.b16 %v1140, %v1139
        %v1150 = vpack.c.b16 %v1142, %v1141
        %v1151 = vpack.c.b16 %v1144, %v1143
        %v1152 = vpack.c.b16 %v1146, %v1145
        %v1160 = vsel %vm327, %v1116, 0
        %1162 = vmatprep.subr.bf16.mxu0 0
        %1163 = vmatpush1.bf16.msra.mxu0 %v1147
        %1164 = vmatprep.subr.bf16.mxu0 0
        %1165 = vmatpush1.bf16.msra.mxu0 %v1148
        %1166 = vmatprep.subr.bf16.mxu0 0
        %1167 = vmatpush1.bf16.msra.mxu0 %v1149
        %1168 = vmatprep.subr.bf16.mxu0 0
        %1169 = vmatpush1.bf16.msra.mxu0 %v1150
        %1170 = vmatprep.subr.bf16.mxu0 0
        %1171 = vmatpush1.bf16.msra.mxu0 %v1151
        %1172 = vmatprep.subr.bf16.mxu0 0
        %1173 = vmatpush1.bf16.msra.mxu0 %v1152
        %1174 = vmatprep.subr.bf16.mxu0 0
        %1175 = vmatpush1.bf16.msra.mxu0 0
        %1176 = vmatprep.subr.bf16.mxu0 0
        %1177 = vmatpush1.bf16.msra.mxu0 0
        %1178 = vmatprep.subr.bf16.mxu0 0
        %1179 = vmatpush1.bf16.msra.mxu0 0
        %1180 = vmatprep.subr.bf16.mxu0 0
        %1181 = vmatpush1.bf16.msra.mxu0 0
        %1182 = vmatprep.subr.bf16.mxu0 0
        %1183 = vmatpush1.bf16.msra.mxu0 0
        %1184 = vmatprep.subr.bf16.mxu0 0
        %1185 = vmatpush1.bf16.msra.mxu0 0
        %1186 = vmatprep.subr.bf16.mxu0 0
        %1187 = vmatpush1.bf16.msra.mxu0 0
        %1188 = vmatprep.subr.bf16.mxu0 0
        %1189 = vmatpush1.bf16.msra.mxu0 0
        %1190 = vmatprep.subr.bf16.mxu0 0
        %1191 = vmatpush1.bf16.msra.mxu0 0
        %1192 = vmatprep.subr.bf16.mxu0 0
        %1193 = vmatpush1.bf16.msra.mxu0 0
        %1194 = vmatprep.mubr.bf16.mxu0 0
        %1195 = vmatmul.mubr.bf16.gmra.mrb[0].mxu0 %v1160
        %v1196 = vpop.f32.mrb[0].mxu0
        %v1197 = vadd.f32 %v1121, %v1196
        %v1198 = vpop.f32.mrb[0].mxu0
        %v1199 = vpop.f32.mrb[0].mxu0
        %v1200 = vadd.f32 %v1121, %v1199
        %v1201 = vpop.f32.mrb[0].mxu0
        %1202 = vdwg.mxu0
        %v1203 = vxor.u32 %v1197, 2147483648
        %v1204 = vxor.u32 %v1200, 2147483648
        %v1205 = vmul.f32 %v1203, 1.442695
        %v1206 = vpow.pop %v1205
        %v1207 = vmul.f32 %v1204, 1.442695
        %v1208 = vpow.pop %v1207
        %v1209 = vadd.f32 %v1206, 1.0
        %v1210 = vadd.f32 %v1208, 1.0
        %v1211 = vrcp.pop %v1209
        %v1212 = vmul.f32 1.0, %v1211
        %v1213 = vrcp.pop %v1210
        %v1214 = vmul.f32 1.0, %v1213
        %1217 = vrot.lane.b32.xlu0 %v1212, 96
        %v1218 = vpop.permute.xlu0 %1217
        %1219 = vrot.lane.b32.xlu0 %v1214, 96
        %v1220 = vpop.permute.xlu0 %1219
        %v1223 = vmul.f32 %v1197, %v1218
        %v1224 = vmul.f32 %v1200, %v1220
        %v1225 = vld [vmem:[#allocation2 + $0x2c0] sm:$0xf]
        %v1226 = vld [vmem:[#allocation2 + $0x2c8] sm:$0xf]
        %v1227 = vld [vmem:[#allocation2 + $0x2d0] sm:$0xf]
        %v1228 = vld [vmem:[#allocation2 + $0x2d8] sm:$0xf]
        %v1229 = vld [vmem:[#allocation2 + $0x2e0] sm:$0xf]
        %v1230 = vld [vmem:[#allocation2 + $0x2e8] sm:$0xf]
        %v1231 = vld [vmem:[#allocation2 + $0x2f0] sm:$0xf]
        %v1232 = vld [vmem:[#allocation2 + $0x2f8] sm:$0xf]
        %v1233 = vld [vmem:[#allocation2 + $0x300] sm:$0xf]
        %v1234 = vld [vmem:[#allocation2 + $0x308] sm:$0xf]
        %v1235 = vld [vmem:[#allocation2 + $0x310] sm:$0xf]
        %v1236 = vld [vmem:[#allocation2 + $0x318] sm:$0xf]
        %v1237 = vld [vmem:[%s2 + $0x8] sm:$0x1]
        %v1239 = vrot.slane %v1224, 7
        %v1241 = vsel %vm268, 0.0, %v1239
        %1243 = vrot.lane.b32.xlu0 %v1223, 32
        %v1244 = vpop.permute.xlu0 %1243
        %1246 = vrot.lane.b32.xlu0 %v1224, 64
        %v1247 = vpop.permute.xlu0 %1246
        %v1249 = vsel %vm208, %v1241, %v1244
        %v1250 = vsel %vm282, %v1249, %v1247
        %v1251 = vrot.slane %v1224, 3
        %v1253 = vsel %vm268, 0.0, %v1251
        %v1254 = vrot.slane %v1223, 4
        %1255 = vrot.lane.b32.xlu0 %v1254, 32
        %v1256 = vpop.permute.xlu0 %1255
        %v1258 = vrot.slane %v1224, 4
        %1259 = vrot.lane.b32.xlu0 %v1258, 64
        %v1260 = vpop.permute.xlu0 %1259
        %v1262 = vsel %vm208, %v1253, %v1256
        %v1263 = vsel %vm282, %v1262, %v1260
        %v1264 = vrot.slane %v1223, 1
        %v1266 = vsel %vm272, %v1264, 0.0
        %1267 = vrot.lane.b32.xlu0 %v1224, 32
        %v1268 = vpop.permute.xlu0 %1267
        %1271 = vrot.lane.b32.xlu0 %v1266, 64
        %v1272 = vpop.permute.xlu0 %1271
        %v1274 = vsel %vm208, %v1223, %v1268
        %v1275 = vsel %vm282, %v1274, %v1272
        %v1276 = vrot.slane %v1223, 5
        %v1278 = vsel %vm272, %v1276, 0.0
        %v1280 = vrot.slane %v1278, 4
        %1281 = vrot.lane.b32.xlu0 %v1280, 64
        %v1282 = vpop.permute.xlu0 %1281
        %v1284 = vsel %vm282, %v1274, %v1282
        %v1286 = vrot.slane %v1263, 4
        %v1288 = vsel %vm630, %v1250, %v1286
        %v1289 = vsel %vm630, %v1275, %v1284
        %v1290 = vpack.c.bf16 %v1289, %v1288
        %v1292 = vlaneseq
        %v1293 = vshrl.u32 %v1292, 7
        %v1294 = vsub.s32 0, %v1293
        %v1295 = vrot.slane %v1237, %v1294
        %v1309 = vunpack.c.l.b16 %v1225
        %v1310 = vunpack.c.l.b16 %v1226
        %v1311 = vunpack.c.l.b16 %v1227
        %v1312 = vunpack.c.l.b16 %v1228
        %v1313 = vunpack.c.l.b16 %v1229
        %v1314 = vunpack.c.l.b16 %v1230
        %v1315 = vunpack.c.l.b16 %v1231
        %v1316 = vunpack.c.l.b16 %v1232
        %v1317 = vunpack.c.l.b16 %v1233
        %v1318 = vunpack.c.l.b16 %v1234
        %v1319 = vunpack.c.l.b16 %v1235
        %v1320 = vunpack.c.l.b16 %v1236
        %v1321 = vpack.c.b16 %v1310, %v1309
        %v1322 = vpack.c.b16 %v1312, %v1311
        %v1323 = vpack.c.b16 %v1314, %v1313
        %v1324 = vpack.c.b16 %v1316, %v1315
        %v1325 = vpack.c.b16 %v1318, %v1317
        %v1326 = vpack.c.b16 %v1320, %v1319
        %v1334 = vsel %vm327, %v1290, 0
        %1336 = vmatprep.subr.bf16.mxu0 0
        %1337 = vmatpush1.bf16.msra.mxu0 %v1321
        %1338 = vmatprep.subr.bf16.mxu0 0
        %1339 = vmatpush1.bf16.msra.mxu0 %v1322
        %1340 = vmatprep.subr.bf16.mxu0 0
        %1341 = vmatpush1.bf16.msra.mxu0 %v1323
        %1342 = vmatprep.subr.bf16.mxu0 0
        %1343 = vmatpush1.bf16.msra.mxu0 %v1324
        %1344 = vmatprep.subr.bf16.mxu0 0
        %1345 = vmatpush1.bf16.msra.mxu0 %v1325
        %1346 = vmatprep.subr.bf16.mxu0 0
        %1347 = vmatpush1.bf16.msra.mxu0 %v1326
        %1348 = vmatprep.subr.bf16.mxu0 0
        %1349 = vmatpush1.bf16.msra.mxu0 0
        %1350 = vmatprep.subr.bf16.mxu0 0
        %1351 = vmatpush1.bf16.msra.mxu0 0
        %1352 = vmatprep.subr.bf16.mxu0 0
        %1353 = vmatpush1.bf16.msra.mxu0 0
        %1354 = vmatprep.subr.bf16.mxu0 0
        %1355 = vmatpush1.bf16.msra.mxu0 0
        %1356 = vmatprep.subr.bf16.mxu0 0
        %1357 = vmatpush1.bf16.msra.mxu0 0
        %1358 = vmatprep.subr.bf16.mxu0 0
        %1359 = vmatpush1.bf16.msra.mxu0 0
        %1360 = vmatprep.subr.bf16.mxu0 0
        %1361 = vmatpush1.bf16.msra.mxu0 0
        %1362 = vmatprep.subr.bf16.mxu0 0
        %1363 = vmatpush1.bf16.msra.mxu0 0
        %1364 = vmatprep.subr.bf16.mxu0 0
        %1365 = vmatpush1.bf16.msra.mxu0 0
        %1366 = vmatprep.subr.bf16.mxu0 0
        %1367 = vmatpush1.bf16.msra.mxu0 0
        %1368 = vmatprep.mubr.bf16.mxu0 0
        %1369 = vmatmul.mubr.bf16.gmra.mrb[0].mxu0 %v1334
        %v1370 = vpop.f32.mrb[0].mxu0
        %v1371 = vadd.f32 %v1295, %v1370
        %v1372 = vpop.f32.mrb[0].mxu0
        %v1373 = vpop.f32.mrb[0].mxu0
        %v1374 = vadd.f32 %v1295, %v1373
        %v1375 = vpop.f32.mrb[0].mxu0
        %1376 = vdwg.mxu0
        %v1377 = vxor.u32 %v1371, 2147483648
        %v1378 = vxor.u32 %v1374, 2147483648
        %v1379 = vmul.f32 %v1377, 1.442695
        %v1380 = vpow.pop %v1379
        %v1381 = vmul.f32 %v1378, 1.442695
        %v1382 = vpow.pop %v1381
        %v1383 = vadd.f32 %v1380, 1.0
        %v1384 = vadd.f32 %v1382, 1.0
        %v1385 = vrcp.pop %v1383
        %v1386 = vmul.f32 1.0, %v1385
        %v1387 = vrcp.pop %v1384
        %v1388 = vmul.f32 1.0, %v1387
        %1391 = vrot.lane.b32.xlu0 %v1386, 96
        %v1392 = vpop.permute.xlu0 %1391
        %1393 = vrot.lane.b32.xlu0 %v1388, 96
        %v1394 = vpop.permute.xlu0 %1393
        %v1397 = vmul.f32 %v1371, %v1392
        %v1398 = vmul.f32 %v1374, %v1394
        %v1399 = vld [vmem:[#allocation2 + $0x320] sm:$0xff]
        %v1400 = vld [vmem:[#allocation2 + $0x328] sm:$0xff]
        %v1401 = vld [vmem:[#allocation2 + $0x330] sm:$0xff]
        %v1402 = vld [vmem:[#allocation2 + $0x338] sm:$0xff]
        %v1403 = vld [vmem:[#allocation2 + $0x340] sm:$0xff]
        %v1404 = vld [vmem:[#allocation2 + $0x348] sm:$0xff]
        %v1405 = vld [vmem:[#allocation2 + $0x350] sm:$0xff]
        %v1406 = vld [vmem:[#allocation2 + $0x358] sm:$0xff]
        %v1407 = vld [vmem:[#allocation2 + $0x360] sm:$0xff]
        %v1408 = vld [vmem:[#allocation2 + $0x368] sm:$0xff]
        %v1409 = vld [vmem:[#allocation2 + $0x370] sm:$0xff]
        %v1410 = vld [vmem:[#allocation2 + $0x378] sm:$0xff]
        %v1411 = vld [vmem:[%s2 + $0x9] sm:$0x3]
        %v1413 = vrot.slane %v1398, 3
        %v1415 = vsel %vm268, 0.0, %v1413
        %1417 = vrot.lane.b32.xlu0 %v1397, 32
        %v1418 = vpop.permute.xlu0 %1417
        %v1420 = vrot.slane %v1397, 4
        %1421 = vrot.lane.b32.xlu0 %v1420, 64
        %v1422 = vpop.permute.xlu0 %1421
        %v1424 = vsel %vm208, %v1415, %v1418
        %v1425 = vsel %vm282, %v1424, %v1422
        %1426 = vrot.lane.b32.xlu0 %v1420, 32
        %v1427 = vpop.permute.xlu0 %1426
        %1429 = vrot.lane.b32.xlu0 %v1398, 64
        %v1430 = vpop.permute.xlu0 %1429
        %v1432 = vsel %vm208, %v1397, %v1427
        %v1433 = vsel %vm282, %v1432, %v1430
        %v1434 = vrot.slane %v1398, 4
        %1435 = vrot.lane.b32.xlu0 %v1434, 32
        %v1436 = vpop.permute.xlu0 %1435
        %v1438 = vsel %vm208, %v1397, %v1436
        %v1439 = vsel %vm282, %v1438, %v1430
        %v1440 = vrot.slane %v1397, 1
        %v1442 = vsel %vm272, %v1440, 0.0
        %1444 = vrot.lane.b32.xlu0 %v1442, 64
        %v1445 = vpop.permute.xlu0 %1444
        %v1447 = vsel %vm208, %v1398, %v1436
        %v1448 = vsel %vm282, %v1447, %v1445
        %v1450 = vrot.slane %v1433, 4
        %v1453 = vrot.slane %v1439, 4
        %v1456 = vrot.slane %v1448, 4
        %v1458 = vsel %vm630, %v1425, %v1450
        %v1459 = vsel %vm630, %v1453, %v1456
        %v1460 = vpack.c.bf16 %v1459, %v1458
        %v1462 = vlaneseq
        %v1463 = vshrl.u32 %v1462, 7
        %v1464 = vsub.s32 0, %v1463
        %v1465 = vrot.slane %v1411, %v1464
        %v1466 = vlaneseq
        %v1467 = vshrl.u32 %v1466, 7
        %v1468 = vsub.s32 1, %v1467
        %v1469 = vrot.slane %v1411, %v1468
        %v1484 = vunpack.c.l.b16 %v1399
        %v1485 = vunpack.c.h.b16 %v1399
        %v1486 = vunpack.c.l.b16 %v1400
        %v1487 = vunpack.c.h.b16 %v1400
        %v1488 = vunpack.c.l.b16 %v1401
        %v1489 = vunpack.c.h.b16 %v1401
        %v1490 = vunpack.c.l.b16 %v1402
        %v1491 = vunpack.c.h.b16 %v1402
        %v1492 = vunpack.c.l.b16 %v1403
        %v1493 = vunpack.c.h.b16 %v1403
        %v1494 = vunpack.c.l.b16 %v1404
        %v1495 = vunpack.c.h.b16 %v1404
        %v1496 = vunpack.c.l.b16 %v1405
        %v1497 = vunpack.c.h.b16 %v1405
        %v1498 = vunpack.c.l.b16 %v1406
        %v1499 = vunpack.c.h.b16 %v1406
        %v1500 = vunpack.c.l.b16 %v1407
        %v1501 = vunpack.c.h.b16 %v1407
        %v1502 = vunpack.c.l.b16 %v1408
        %v1503 = vunpack.c.h.b16 %v1408
        %v1504 = vunpack.c.l.b16 %v1409
        %v1505 = vunpack.c.h.b16 %v1409
        %v1506 = vunpack.c.l.b16 %v1410
        %v1507 = vunpack.c.h.b16 %v1410
        %v1508 = vpack.c.b16 %v1486, %v1484
        %v1509 = vpack.c.b16 %v1487, %v1485
        %v1510 = vpack.c.b16 %v1490, %v1488
        %v1511 = vpack.c.b16 %v1491, %v1489
        %v1512 = vpack.c.b16 %v1494, %v1492
        %v1513 = vpack.c.b16 %v1495, %v1493
        %v1514 = vpack.c.b16 %v1498, %v1496
        %v1515 = vpack.c.b16 %v1499, %v1497
        %v1516 = vpack.c.b16 %v1502, %v1500
        %v1517 = vpack.c.b16 %v1503, %v1501
        %v1518 = vpack.c.b16 %v1506, %v1504
        %v1519 = vpack.c.b16 %v1507, %v1505
        %v1533 = vsel %vm327, %v1460, 0
        %1535 = vmatprep.subr.bf16.mxu0 %v1509
        %1536 = vmatpush1.bf16.msra.mxu0 %v1508
        %1537 = vmatprep.subr.bf16.mxu0 %v1511
        %1538 = vmatpush1.bf16.msra.mxu0 %v1510
        %1539 = vmatprep.subr.bf16.mxu0 %v1513
        %1540 = vmatpush1.bf16.msra.mxu0 %v1512
        %1541 = vmatprep.subr.bf16.mxu0 %v1515
        %1542 = vmatpush1.bf16.msra.mxu0 %v1514
        %1543 = vmatprep.subr.bf16.mxu0 %v1517
        %1544 = vmatpush1.bf16.msra.mxu0 %v1516
        %1545 = vmatprep.subr.bf16.mxu0 %v1519
        %1546 = vmatpush1.bf16.msra.mxu0 %v1518
        %1547 = vmatprep.subr.bf16.mxu0 0
        %1548 = vmatpush1.bf16.msra.mxu0 0
        %1549 = vmatprep.subr.bf16.mxu0 0
        %1550 = vmatpush1.bf16.msra.mxu0 0
        %1551 = vmatprep.subr.bf16.mxu0 0
        %1552 = vmatpush1.bf16.msra.mxu0 0
        %1553 = vmatprep.subr.bf16.mxu0 0
        %1554 = vmatpush1.bf16.msra.mxu0 0
        %1555 = vmatprep.subr.bf16.mxu0 0
        %1556 = vmatpush1.bf16.msra.mxu0 0
        %1557 = vmatprep.subr.bf16.mxu0 0
        %1558 = vmatpush1.bf16.msra.mxu0 0
        %1559 = vmatprep.subr.bf16.mxu0 0
        %1560 = vmatpush1.bf16.msra.mxu0 0
        %1561 = vmatprep.subr.bf16.mxu0 0
        %1562 = vmatpush1.bf16.msra.mxu0 0
        %1563 = vmatprep.subr.bf16.mxu0 0
        %1564 = vmatpush1.bf16.msra.mxu0 0
        %1565 = vmatprep.subr.bf16.mxu0 0
        %1566 = vmatpush1.bf16.msra.mxu0 0
        %1567 = vmatprep.mubr.bf16.mxu0 0
        %1568 = vmatmul.mubr.bf16.gmra.mrb[0].mxu0 %v1533
        %v1569 = vpop.f32.mrb[0].mxu0
        %v1570 = vadd.f32 %v1465, %v1569
        %v1571 = vpop.f32.mrb[0].mxu0
        %v1572 = vadd.f32 %v1469, %v1571
        %v1573 = vpop.f32.mrb[0].mxu0
        %v1574 = vadd.f32 %v1465, %v1573
        %v1575 = vpop.f32.mrb[0].mxu0
        %v1576 = vadd.f32 %v1469, %v1575
        %1577 = vdwg.mxu0
        %v1578 = vxor.u32 %v1572, 2147483648
        %v1579 = vxor.u32 %v1576, 2147483648
        %v1580 = vmul.f32 %v1578, 1.442695
        %v1581 = vpow.pop %v1580
        %v1582 = vmul.f32 %v1579, 1.442695
        %v1583 = vpow.pop %v1582
        %v1584 = vadd.f32 %v1581, 1.0
        %v1585 = vadd.f32 %v1583, 1.0
        %v1586 = vrcp.pop %v1584
        %v1587 = vmul.f32 1.0, %v1586
        %v1588 = vrcp.pop %v1585
        %v1589 = vmul.f32 1.0, %v1588
        %v1590 = vmul.f32 %v1570, %v1587
        %v1591 = vmul.f32 %v1574, %v1589
        %v1592 = vld [vmem:[#allocation2 + $0x380] sm:$0xf]
        %v1593 = vld [vmem:[#allocation2 + $0x388] sm:$0xf]
        %v1594 = vld [vmem:[#allocation2 + $0x390] sm:$0xf]
        %v1595 = vld [vmem:[#allocation2 + $0x398] sm:$0xf]
        %v1596 = vld [vmem:[#allocation2 + $0x3a0] sm:$0xf]
        %v1597 = vld [vmem:[#allocation2 + $0x3a8] sm:$0xf]
        %v1598 = vld [vmem:[#allocation2 + $0x3b0] sm:$0xf]
        %v1599 = vld [vmem:[#allocation2 + $0x3b8] sm:$0xf]
        %v1600 = vld [vmem:[#allocation2 + $0x3c0] sm:$0xf]
        %v1601 = vld [vmem:[#allocation2 + $0x3c8] sm:$0xf]
        %v1602 = vld [vmem:[#allocation2 + $0x3d0] sm:$0xf]
        %v1603 = vld [vmem:[#allocation2 + $0x3d8] sm:$0xf]
        %v1604 = vld [vmem:[#allocation2 + $0x3e0] sm:$0xf]
        %v1605 = vld [vmem:[#allocation2 + $0x3e8] sm:$0xf]
        %v1606 = vld [vmem:[#allocation2 + $0x3f0] sm:$0xf]
        %v1607 = vld [vmem:[#allocation2 + $0x3f8] sm:$0xf]
        %v1608 = vld [vmem:[#allocation2 + $0x400] sm:$0xf]
        %v1609 = vld [vmem:[#allocation2 + $0x408] sm:$0xf]
        %v1610 = vld [vmem:[#allocation2 + $0x410] sm:$0xf]
        %v1611 = vld [vmem:[#allocation2 + $0x418] sm:$0xf]
        %v1612 = vld [vmem:[#allocation2 + $0x420] sm:$0xf]
        %v1613 = vld [vmem:[#allocation2 + $0x428] sm:$0xf]
        %v1614 = vld [vmem:[#allocation2 + $0x430] sm:$0xf]
        %v1615 = vld [vmem:[#allocation2 + $0x438] sm:$0xf]
        %v1616 = vld [vmem:[#allocation2 + $0x440] sm:$0xf]
        %v1617 = vld [vmem:[#allocation2 + $0x448] sm:$0xf]
        %v1618 = vld [vmem:[#allocation2 + $0x450] sm:$0xf]
        %v1619 = vld [vmem:[#allocation2 + $0x458] sm:$0xf]
        %v1620 = vld [vmem:[#allocation2 + $0x460] sm:$0xf]
        %v1621 = vld [vmem:[#allocation2 + $0x468] sm:$0xf]
        %v1622 = vld [vmem:[#allocation2 + $0x470] sm:$0xf]
        %v1623 = vld [vmem:[#allocation2 + $0x478] sm:$0xf]
        %v1624 = vld [vmem:[#allocation2 + $0x480] sm:$0xf]
        %v1625 = vld [vmem:[#allocation2 + $0x488] sm:$0xf]
        %v1626 = vld [vmem:[#allocation2 + $0x490] sm:$0xf]
        %v1627 = vld [vmem:[#allocation2 + $0x498] sm:$0xf]
        %v1628 = vld [vmem:[#allocation2 + $0x4a0] sm:$0xf]
        %v1629 = vld [vmem:[#allocation2 + $0x4a8] sm:$0xf]
        %v1630 = vld [vmem:[#allocation2 + $0x4b0] sm:$0xf]
        %v1631 = vld [vmem:[#allocation2 + $0x4b8] sm:$0xf]
        %v1632 = vld [vmem:[#allocation2 + $0x4c0] sm:$0xf]
        %v1633 = vld [vmem:[#allocation2 + $0x4c8] sm:$0xf]
        %v1634 = vld [vmem:[#allocation2 + $0x4d0] sm:$0xf]
        %v1635 = vld [vmem:[#allocation2 + $0x4d8] sm:$0xf]
        %v1636 = vld [vmem:[#allocation2 + $0x4e0] sm:$0xf]
        %v1637 = vld [vmem:[#allocation2 + $0x4e8] sm:$0xf]
        %v1638 = vld [vmem:[#allocation2 + $0x4f0] sm:$0xf]
        %v1639 = vld [vmem:[#allocation2 + $0x4f8] sm:$0xf]
        %v1640 = vld [vmem:[%s2 + $0xb] sm:$0x1]
        %v1642 = vrot.slane %v1591, 3
        %v1644 = vsel %vm268, 0.0, %v1642
        %v1646 = vrot.slane %v1590, 4
        %v1648 = vrot.slane %v1591, 4
        %v1649 = vrot.slane %v1590, 1
        %v1651 = vsel %vm272, %v1649, 0.0
        %v1652 = vrot.slane %v1646, 4
        %v1655 = vrot.slane %v1648, 4
        %v1658 = vrot.slane %v1651, 4
        %v1660 = vsel %vm630, %v1644, %v1646
        %v1661 = vsel %vm630, %v1590, %v1652
        %v1662 = vsel %vm630, %v1646, %v1648
        %v1663 = vsel %vm630, %v1655, %v1655
        %v1664 = vsel %vm630, %v1648, %v1658
        %v1665 = vpack.c.bf16 %v1662, %v1660
        %v1666 = vpack.c.bf16 %v1663, %v1661
        %v1667 = vpack.c.bf16 %v1664, %v1662
        %v1669 = vlaneseq
        %v1670 = vshrl.u32 %v1669, 7
        %v1671 = vsub.s32 0, %v1670
        %v1672 = vrot.slane %v1640, %v1671
        %v1722 = vunpack.c.l.b16 %v1592
        %v1723 = vunpack.c.l.b16 %v1593
        %v1724 = vunpack.c.l.b16 %v1594
        %v1725 = vunpack.c.l.b16 %v1595
        %v1726 = vunpack.c.l.b16 %v1596
        %v1727 = vunpack.c.l.b16 %v1597
        %v1728 = vunpack.c.l.b16 %v1598
        %v1729 = vunpack.c.l.b16 %v1599
        %v1730 = vunpack.c.l.b16 %v1600
        %v1731 = vunpack.c.l.b16 %v1601
        %v1732 = vunpack.c.l.b16 %v1602
        %v1733 = vunpack.c.l.b16 %v1603
        %v1734 = vunpack.c.l.b16 %v1604
        %v1735 = vunpack.c.l.b16 %v1605
        %v1736 = vunpack.c.l.b16 %v1606
        %v1737 = vunpack.c.l.b16 %v1607
        %v1738 = vunpack.c.l.b16 %v1608
        %v1739 = vunpack.c.l.b16 %v1609
        %v1740 = vunpack.c.l.b16 %v1610
        %v1741 = vunpack.c.l.b16 %v1611
        %v1742 = vunpack.c.l.b16 %v1612
        %v1743 = vunpack.c.l.b16 %v1613
        %v1744 = vunpack.c.l.b16 %v1614
        %v1745 = vunpack.c.l.b16 %v1615
        %v1746 = vunpack.c.l.b16 %v1616
        %v1747 = vunpack.c.l.b16 %v1617
        %v1748 = vunpack.c.l.b16 %v1618
        %v1749 = vunpack.c.l.b16 %v1619
        %v1750 = vunpack.c.l.b16 %v1620
        %v1751 = vunpack.c.l.b16 %v1621
        %v1752 = vunpack.c.l.b16 %v1622
        %v1753 = vunpack.c.l.b16 %v1623
        %v1754 = vunpack.c.l.b16 %v1624
        %v1755 = vunpack.c.l.b16 %v1625
        %v1756 = vunpack.c.l.b16 %v1626
        %v1757 = vunpack.c.l.b16 %v1627
        %v1758 = vunpack.c.l.b16 %v1628
        %v1759 = vunpack.c.l.b16 %v1629
        %v1760 = vunpack.c.l.b16 %v1630
        %v1761 = vunpack.c.l.b16 %v1631
        %v1762 = vunpack.c.l.b16 %v1632
        %v1763 = vunpack.c.l.b16 %v1633
        %v1764 = vunpack.c.l.b16 %v1634
        %v1765 = vunpack.c.l.b16 %v1635
        %v1766 = vunpack.c.l.b16 %v1636
        %v1767 = vunpack.c.l.b16 %v1637
        %v1768 = vunpack.c.l.b16 %v1638
        %v1769 = vunpack.c.l.b16 %v1639
        %v1770 = vpack.c.b16 %v1723, %v1722
        %v1771 = vpack.c.b16 %v1725, %v1724
        %v1772 = vpack.c.b16 %v1727, %v1726
        %v1773 = vpack.c.b16 %v1729, %v1728
        %v1774 = vpack.c.b16 %v1731, %v1730
        %v1775 = vpack.c.b16 %v1733, %v1732
        %v1776 = vpack.c.b16 %v1735, %v1734
        %v1777 = vpack.c.b16 %v1737, %v1736
        %v1778 = vpack.c.b16 %v1739, %v1738
        %v1779 = vpack.c.b16 %v1741, %v1740
        %v1780 = vpack.c.b16 %v1743, %v1742
        %v1781 = vpack.c.b16 %v1745, %v1744
        %v1782 = vpack.c.b16 %v1747, %v1746
        %v1783 = vpack.c.b16 %v1749, %v1748
        %v1784 = vpack.c.b16 %v1751, %v1750
        %v1785 = vpack.c.b16 %v1753, %v1752
        %v1786 = vpack.c.b16 %v1755, %v1754
        %v1787 = vpack.c.b16 %v1757, %v1756
        %v1788 = vpack.c.b16 %v1759, %v1758
        %v1789 = vpack.c.b16 %v1761, %v1760
        %v1790 = vpack.c.b16 %v1763, %v1762
        %v1791 = vpack.c.b16 %v1765, %v1764
        %v1792 = vpack.c.b16 %v1767, %v1766
        %v1793 = vpack.c.b16 %v1769, %v1768
        %1818 = vmatprep.subr.bf16.mxu0 0
        %1819 = vmatpush1.bf16.msra.mxu0 %v1770
        %1820 = vmatprep.subr.bf16.mxu0 0
        %1821 = vmatpush1.bf16.msra.mxu0 %v1771
        %1822 = vmatprep.subr.bf16.mxu0 0
        %1823 = vmatpush1.bf16.msra.mxu0 %v1772
        %1824 = vmatprep.subr.bf16.mxu0 0
        %1825 = vmatpush1.bf16.msra.mxu0 %v1773
        %1826 = vmatprep.subr.bf16.mxu0 0
        %1827 = vmatpush1.bf16.msra.mxu0 %v1774
        %1828 = vmatprep.subr.bf16.mxu0 0
        %1829 = vmatpush1.bf16.msra.mxu0 %v1775
        %1830 = vmatprep.subr.bf16.mxu0 0
        %1831 = vmatpush1.bf16.msra.mxu0 %v1776
        %1832 = vmatprep.subr.bf16.mxu0 0
        %1833 = vmatpush1.bf16.msra.mxu0 %v1777
        %1834 = vmatprep.subr.bf16.mxu0 0
        %1835 = vmatpush1.bf16.msra.mxu0 %v1778
        %1836 = vmatprep.subr.bf16.mxu0 0
        %1837 = vmatpush1.bf16.msra.mxu0 %v1779
        %1838 = vmatprep.subr.bf16.mxu0 0
        %1839 = vmatpush1.bf16.msra.mxu0 %v1780
        %1840 = vmatprep.subr.bf16.mxu0 0
        %1841 = vmatpush1.bf16.msra.mxu0 %v1781
        %1842 = vmatprep.subr.bf16.mxu0 0
        %1843 = vmatpush1.bf16.msra.mxu0 %v1782
        %1844 = vmatprep.subr.bf16.mxu0 0
        %1845 = vmatpush1.bf16.msra.mxu0 %v1783
        %1846 = vmatprep.subr.bf16.mxu0 0
        %1847 = vmatpush1.bf16.msra.mxu0 %v1784
        %1848 = vmatprep.subr.bf16.mxu0 0
        %1849 = vmatpush1.bf16.msra.mxu0 %v1785
        %1850 = vmatprep.mubr.bf16.mxu0 %v1666
        %1851 = vmatmul.mubr.bf16.gmra.mrb[0].mxu0 %v1665
        %v1852 = vpop.f32.mrb[0].mxu0
        %v1853 = vadd.f32 %v1672, %v1852
        %v1854 = vpop.f32.mrb[0].mxu0
        %v1855 = vpop.f32.mrb[0].mxu0
        %v1856 = vadd.f32 %v1672, %v1855
        %v1857 = vpop.f32.mrb[0].mxu0
        %1858 = vdwg.mxu0
        %1859 = vmatprep.subr.bf16.mxu0 0
        %1860 = vmatpush1.bf16.msra.mxu0 %v1786
        %1861 = vmatprep.subr.bf16.mxu0 0
        %1862 = vmatpush1.bf16.msra.mxu0 %v1787
        %1863 = vmatprep.subr.bf16.mxu0 0
        %1864 = vmatpush1.bf16.msra.mxu0 %v1788
        %1865 = vmatprep.subr.bf16.mxu0 0
        %1866 = vmatpush1.bf16.msra.mxu0 %v1789
        %1867 = vmatprep.subr.bf16.mxu0 0
        %1868 = vmatpush1.bf16.msra.mxu0 %v1790
        %1869 = vmatprep.subr.bf16.mxu0 0
        %1870 = vmatpush1.bf16.msra.mxu0 %v1791
        %1871 = vmatprep.subr.bf16.mxu0 0
        %1872 = vmatpush1.bf16.msra.mxu0 %v1792
        %1873 = vmatprep.subr.bf16.mxu0 0
        %1874 = vmatpush1.bf16.msra.mxu0 %v1793
        %1875 = vmatprep.subr.bf16.mxu0 0
        %1876 = vmatpush1.bf16.msra.mxu0 0
        %1877 = vmatprep.subr.bf16.mxu0 0
        %1878 = vmatpush1.bf16.msra.mxu0 0
        %1879 = vmatprep.subr.bf16.mxu0 0
        %1880 = vmatpush1.bf16.msra.mxu0 0
        %1881 = vmatprep.subr.bf16.mxu0 0
        %1882 = vmatpush1.bf16.msra.mxu0 0
        %1883 = vmatprep.subr.bf16.mxu0 0
        %1884 = vmatpush1.bf16.msra.mxu0 0
        %1885 = vmatprep.subr.bf16.mxu0 0
        %1886 = vmatpush1.bf16.msra.mxu0 0
        %1887 = vmatprep.subr.bf16.mxu0 0
        %1888 = vmatpush1.bf16.msra.mxu0 0
        %1889 = vmatprep.subr.bf16.mxu0 0
        %1890 = vmatpush1.bf16.msra.mxu0 0
        %1891 = vmatprep.mubr.bf16.mxu0 0
        %1892 = vmatmul.mubr.bf16.gmra.mrb[0].mxu0 %v1667
        %v1893 = vpop.f32.mrb[0].mxu0
        %v1894 = vadd.f32 %v1853, %v1893
        %v1895 = vpop.f32.mrb[0].mxu0
        %v1896 = vpop.f32.mrb[0].mxu0
        %v1897 = vadd.f32 %v1856, %v1896
        %v1898 = vpop.f32.mrb[0].mxu0
        %1899 = vdwg.mxu0
        %v1900 = vxor.u32 %v1894, 2147483648
        %v1901 = vxor.u32 %v1897, 2147483648
        %v1902 = vmul.f32 %v1900, 1.442695
        %v1903 = vpow.pop %v1902
        %v1904 = vmul.f32 %v1901, 1.442695
        %v1905 = vpow.pop %v1904
        %v1906 = vadd.f32 %v1903, 1.0
        %v1907 = vadd.f32 %v1905, 1.0
        %v1908 = vrcp.pop %v1906
        %v1909 = vmul.f32 1.0, %v1908
        %v1910 = vrcp.pop %v1907
        %v1911 = vmul.f32 1.0, %v1910
        %1912 = vst [vmem:[%s182] sm:$0xff] %v1909
        %1913 = vst [vmem:[%s182 + $0x8] sm:$0xff] %v1911
        %p1914 = scmp.lt.s32.totalorder %s15, 1
        %s1915 = scalar_select %p1914, %s15, 1
        %s1916 = smul.addr %s1915, 2
        %s1917 = smul.addr %s1916, 8
        %s1918 = scalar_lea.vmem %s3, %s1917
        // Predicated region
        $region37: #{converter_forward.1} parent=31 // pred_check
          %p1919 = pneg %p101
        $region38: #{converter_forward.1} parent=31 // pred_check_branch
          %1921 = sbr.rel (%p1919) target = $region40
        $region39: #{converter_forward.1} parent=31 // pred_region
          _
        $region40: #{converter_forward.1} parent=31 // pred_fallthru
          _
      $region32: #{converter_forward.1} parent=5 // pred_fallthru
        _
      %p1922 = scmp.le.s32.totalorder 2, %s10
      // Predicated region
      $region41: #{converter_forward.1} parent=5 // pred_check
        %p1923 = pneg %p1922
      $region42: #{converter_forward.1} parent=5 // pred_check_branch
        %1925 = sbr.rel (%p1923) target = $region44
      $region43: #{converter_forward.1} parent=5 // pred_region
        %s1926 = ssub.s32 %s10, 2
        // Predicated region
        $region45: #{converter_forward.1} parent=43 // pred_check
          %p1927 = pneg %p107
        $region46: #{converter_forward.1} parent=43 // pred_check_branch
          %1929 = sbr.rel (%p1927) target = $region48
        $region47: #{converter_forward.1} parent=43 // pred_region
          %p1930 = scmp.lt.s32.totalorder %s16, 1
          %s1931 = scalar_select %p1930, %s16, 1
          %s1932 = smul.addr %s1931, 2
          %s1933 = smul.addr %s1932, 8
          %s1934 = scalar_lea.vmem %s3, %s1933
        $region48: #{converter_forward.1} parent=43 // pred_fallthru
          _
      $region44: #{converter_forward.1} parent=5 // pred_fallthru
        _
    $region6: #{converter_forward.1} parent=1 // loop_footer
      %s14 = sadd.s32 1, %s10
    $region7: #{converter_forward.1} parent=1 // loop_footer_branch
      %9 = sbr.rel target = $region3
    $region8: #{converter_forward.1} parent=1 // loop_exit
      _
    %1935 = vsyncpa [#allocation3], 1
    %s1936 = scalar_lea.sflag [#allocation3], 1
    %1937 = vsyncpa %s1936, 1

</llo_original>
